<compile_context>
chip_gen: v6e
topology: v6e:2x2x1
jax: 0.10.0
libtpu: 0.0.40
codegen_flags: <defaults>
</compile_context>

<pallas_src>
import functools

import jax
import jax.numpy as jnp
from jax.experimental import pallas as pl
from jax.experimental.pallas import tpu as pltpu


LAYER_DIMS = (1200, 128, 256, 512, 64, 5)   # PyTorch Linear sizes
_LANE = 128
_BF16_SUBLANE = 16                          # sublane packing for bf16 tiles


def _round_up(n, m):
    return ((n + m - 1) // m) * m


def mlp_kernel(x_ref,
               w1_ref, b1_ref,
               w2_ref, b2_ref,
               w3_ref, b3_ref,
               w4_ref, b4_ref,
               w5_ref, b5_ref,
               o_ref):
    """One batch tile of the full 5-layer MLP (all matmuls on the MXU)."""
    h = x_ref[...]                                             # bf16 (bt, 1200)

    def dense(h, w_ref, b_ref, *, relu):
        # bf16 operands -> MXU, f32 accumulation; bias/ReLU in f32 on the VPU.
        acc = jnp.dot(h.astype(jnp.bfloat16), w_ref[...],
                      preferred_element_type=jnp.float32) + b_ref[...]
        return jnp.maximum(acc, 0.0) if relu else acc

    h = dense(h, w1_ref, b1_ref, relu=True)
    h = dense(h, w2_ref, b2_ref, relu=True)
    h = dense(h, w3_ref, b3_ref, relu=True)
    h = dense(h, w4_ref, b4_ref, relu=True)
    h = dense(h, w5_ref, b5_ref, relu=False)
    o_ref[...] = jnp.tanh(h).astype(o_ref.dtype)               # tanh -> EUP


def prepare_params(params):
    """One-time weight prep: pad output dims to 128 lanes, cast weights to bf16.

    params: list of (W (in, out) f32, b (1, out) f32) in math layout (x @ W + b).
    The first layer's K stays at the true 1200 (matches unpadded x).  Each
    layer's K is padded to the previous layer's padded N.  Zero padding is
    exact: padded columns get bias 0 -> relu(0)=0 activations which hit zero
    rows of the next weight; padded final lanes give tanh(0)=0 and are sliced.
    """
    prepped = []
    prev_out_p = params[0][0].shape[0]        # 1200 — x feature dim, unpadded
    for w, b in params:
        d_in, d_out = w.shape
        d_in_p = prev_out_p
        d_out_p = _round_up(d_out, _LANE)
        w_p = jnp.pad(w, ((0, d_in_p - d_in), (0, d_out_p - d_out)))
        b_p = jnp.pad(b.reshape(1, d_out), ((0, 0), (0, d_out_p - d_out)))
        prepped.append((w_p.astype(jnp.bfloat16), b_p.astype(jnp.float32)))
        prev_out_p = d_out_p
    return prepped


@functools.partial(jax.jit, static_argnames=("batch_tile",))
def torch_model_forward(x, prepped, *, batch_tile=512):
    """Forward pass of Torch_Model.

    x:       (B, 1200) float32
    prepped: output of prepare_params (call once; reused across calls).
    batch_tile: target rows per grid step (clamped to the real batch for small
             B).  512 is a good default on v5e/v6e/v7x; on v7x prefer a value
             giving an even grid (>= 2 steps) so the "parallel" batch axis
             balances across both TensorCores.
    """
    B, d_in = x.shape
    d_out_real = LAYER_DIMS[-1]
    d_out_p = prepped[-1][0].shape[1]

    bt = min(batch_tile, _round_up(B, _BF16_SUBLANE))
    bt = max(_BF16_SUBLANE, _round_up(bt, _BF16_SUBLANE))
    B_p = _round_up(B, bt)

    # Single cheap cast in the wrapper; batch-only pad, and only when needed.
    x_bf = x.astype(jnp.bfloat16)
    if B_p != B:
        x_bf = jnp.pad(x_bf, ((0, B_p - B), (0, 0)))

    weight_args = []
    in_specs = [pl.BlockSpec((bt, d_in), lambda i: (i, 0))]
    for (w, b) in prepped:
        weight_args += [w, b]
        # Grid-invariant blocks: whole padded weight/bias stays resident in VMEM.
        in_specs += [
            pl.BlockSpec(w.shape, lambda i: (0, 0)),
            pl.BlockSpec(b.shape, lambda i: (0, 0)),
        ]
    out_spec = pl.BlockSpec((bt, d_out_p), lambda i: (i, 0))

    flops = 2 * B_p * sum(w.shape[0] * w.shape[1] for w, _ in prepped)
    bytes_accessed = (
        x_bf.size * 2
        + sum(w.size * 2 + b.size * 4 for w, b in prepped)
        + B_p * d_out_p * 4
    )
    cost = pl.CostEstimate(flops=flops,
                           transcendentals=B_p * d_out_p,
                           bytes_accessed=bytes_accessed)

    out_padded = pl.pallas_call(
        mlp_kernel,
        out_shape=jax.ShapeDtypeStruct((B_p, d_out_p), jnp.float32),
        grid_spec=pltpu.PrefetchScalarGridSpec(
            num_scalar_prefetch=0,
            grid=(B_p // bt,),
            in_specs=in_specs,
            out_specs=out_spec,
        ),
        compiler_params=pltpu.CompilerParams(
            dimension_semantics=("parallel",),
        ),
        cost_estimate=cost,
    )(x_bf, *weight_args)

    return out_padded[:B, :d_out_real]


def init_params(key):
    """Deterministic PyTorch-style uniform init; weights stored (in, out)."""
    params = []
    for i in range(len(LAYER_DIMS) - 1):
        fan_in, fan_out = LAYER_DIMS[i], LAYER_DIMS[i + 1]
        key, kw, kb = jax.random.split(key, 3)
        bound = 1.0 / float(fan_in) ** 0.5
        w = jax.random.uniform(kw, (fan_in, fan_out), jnp.float32, -bound, bound)
        b = jax.random.uniform(kb, (1, fan_out), jnp.float32, -bound, bound)
        params.append((w, b))
    return params


def reference_forward(x, params, *, mixed_precision=True):
    """Pure-JAX reference.  mixed_precision=True mirrors the kernel's bf16 MXU inputs."""
    h = x.astype(jnp.float32)
    for i, (w, b) in enumerate(params):
        if mixed_precision:
            h = jnp.dot(h.astype(jnp.bfloat16), w.astype(jnp.bfloat16),
                        preferred_element_type=jnp.float32) + b
        else:
            h = jnp.dot(h, w, preferred_element_type=jnp.float32) + b
        h = jnp.maximum(h, 0.0) if i < len(params) - 1 else jnp.tanh(h)
    return h


if __name__ == "__main__":
    key = jax.random.PRNGKey(0)
    kx, kp = jax.random.split(key)

    B = 16
    x = jax.random.normal(kx, (B, 1200), jnp.float32)
    params = init_params(kp)
    prepped = prepare_params(params)          # once, outside the per-call path

    out = torch_model_forward(x, prepped, batch_tile=512)
    out = jax.block_until_ready(out)
    assert out.shape == (B, 5), out.shape

    # Tight check vs. a reference using the same bf16-operand / f32-accumulate policy.
    ref_mixed = reference_forward(x, params, mixed_precision=True)
    assert jnp.allclose(out, ref_mixed, atol=2e-3, rtol=2e-3), \
        float(jnp.max(jnp.abs(out - ref_mixed)))

    # Looser sanity check vs. the pure-f32 PyTorch-equivalent forward.
    # (bf16 MXU operands with f32 accumulation is a deliberate precision policy.)
    ref_f32 = reference_forward(x, params, mixed_precision=False)
    assert jnp.allclose(out, ref_f32, atol=5e-2, rtol=5e-2), \
        float(jnp.max(jnp.abs(out - ref_f32)))

    print("KERNEL_OK")
</pallas_src>

<mosaic_0001>
module attributes {stable_mosaic.version = 11 : i64} {
  func.func @mlp_kernel(%arg0: i32, %arg1: memref<16x1200xbf16, #tpu.memory_space<vmem>>, %arg2: memref<1200x128xbf16, #tpu.memory_space<vmem>>, %arg3: memref<1x128xf32, #tpu.memory_space<vmem>>, %arg4: memref<128x256xbf16, #tpu.memory_space<vmem>>, %arg5: memref<1x256xf32, #tpu.memory_space<vmem>>, %arg6: memref<256x512xbf16, #tpu.memory_space<vmem>>, %arg7: memref<1x512xf32, #tpu.memory_space<vmem>>, %arg8: memref<512x128xbf16, #tpu.memory_space<vmem>>, %arg9: memref<1x128xf32, #tpu.memory_space<vmem>>, %arg10: memref<128x128xbf16, #tpu.memory_space<vmem>>, %arg11: memref<1x128xf32, #tpu.memory_space<vmem>>, %arg12: memref<16x128xf32, #tpu.memory_space<vmem>>) attributes {dimension_semantics = [#tpu.dimension_semantics<parallel>], iteration_bounds = array<i64: 1>, scalar_prefetch = 0 : i64, scratch_operands = 0 : i64, tpu.core_type = #tpu.core_type<tc>, window_params = [{transform_indices = @transform_0, window_bounds = array<i64: 16, 1200>}, {pipeline_mode = #tpu.pipeline_mode<synchronous>, transform_indices = @transform_1, window_bounds = array<i64: 1200, 128>}, {pipeline_mode = #tpu.pipeline_mode<synchronous>, transform_indices = @transform_2, window_bounds = array<i64: 1, 128>}, {pipeline_mode = #tpu.pipeline_mode<synchronous>, transform_indices = @transform_3, window_bounds = array<i64: 128, 256>}, {pipeline_mode = #tpu.pipeline_mode<synchronous>, transform_indices = @transform_4, window_bounds = array<i64: 1, 256>}, {pipeline_mode = #tpu.pipeline_mode<synchronous>, transform_indices = @transform_5, window_bounds = array<i64: 256, 512>}, {pipeline_mode = #tpu.pipeline_mode<synchronous>, transform_indices = @transform_6, window_bounds = array<i64: 1, 512>}, {pipeline_mode = #tpu.pipeline_mode<synchronous>, transform_indices = @transform_7, window_bounds = array<i64: 512, 128>}, {pipeline_mode = #tpu.pipeline_mode<synchronous>, transform_indices = @transform_8, window_bounds = array<i64: 1, 128>}, {pipeline_mode = #tpu.pipeline_mode<synchronous>, transform_indices = @transform_9, window_bounds = array<i64: 128, 128>}, {pipeline_mode = #tpu.pipeline_mode<synchronous>, transform_indices = @transform_10, window_bounds = array<i64: 1, 128>}, {transform_indices = @transform_11, window_bounds = array<i64: 16, 128>}]} {
    %c0 = arith.constant 0 : index
    %c0_0 = arith.constant 0 : index
    %0 = vector.load %arg1[%c0, %c0_0] : memref<16x1200xbf16, #tpu.memory_space<vmem>>, vector<16x1200xbf16>
    %c0_1 = arith.constant 0 : index
    %c0_2 = arith.constant 0 : index
    %1 = vector.load %arg2[%c0_1, %c0_2] : memref<1200x128xbf16, #tpu.memory_space<vmem>>, vector<1200x128xbf16>
    %cst = arith.constant dense<0.000000e+00> : vector<16x128xf32>
    %2 = tpu.matmul %0, %1, %cst {dimension_numbers = #tpu.dot_dimension_numbers<[1], [0], [0], [1], [0, 0, 1, 1], [], []>} : vector<16x1200xbf16>, vector<1200x128xbf16>, vector<16x128xf32> -> vector<16x128xf32>
    %c0_3 = arith.constant 0 : index
    %c0_4 = arith.constant 0 : index
    %3 = vector.load %arg3[%c0_3, %c0_4] : memref<1x128xf32, #tpu.memory_space<vmem>>, vector<1x128xf32>
    %4 = vector.broadcast %3 : vector<1x128xf32> to vector<16x128xf32>
    %5 = arith.addf %2, %4 : vector<16x128xf32>
    %cst_5 = arith.constant 0.000000e+00 : f32
    %6 = vector.broadcast %cst_5 : f32 to vector<16x128xf32>
    %7 = arith.maximumf %5, %6 : vector<16x128xf32>
    %8 = arith.truncf %7 : vector<16x128xf32> to vector<16x128xbf16>
    %c0_6 = arith.constant 0 : index
    %c0_7 = arith.constant 0 : index
    %9 = vector.load %arg4[%c0_6, %c0_7] : memref<128x256xbf16, #tpu.memory_space<vmem>>, vector<128x256xbf16>
    %cst_8 = arith.constant dense<0.000000e+00> : vector<16x256xf32>
    %10 = tpu.matmul %8, %9, %cst_8 {dimension_numbers = #tpu.dot_dimension_numbers<[1], [0], [0], [1], [0, 0, 1, 1], [], []>} : vector<16x128xbf16>, vector<128x256xbf16>, vector<16x256xf32> -> vector<16x256xf32>
    %c0_9 = arith.constant 0 : index
    %c0_10 = arith.constant 0 : index
    %11 = vector.load %arg5[%c0_9, %c0_10] : memref<1x256xf32, #tpu.memory_space<vmem>>, vector<1x256xf32>
    %12 = vector.broadcast %11 : vector<1x256xf32> to vector<16x256xf32>
    %13 = arith.addf %10, %12 : vector<16x256xf32>
    %cst_11 = arith.constant 0.000000e+00 : f32
    %14 = vector.broadcast %cst_11 : f32 to vector<16x256xf32>
    %15 = arith.maximumf %13, %14 : vector<16x256xf32>
    %16 = arith.truncf %15 : vector<16x256xf32> to vector<16x256xbf16>
    %c0_12 = arith.constant 0 : index
    %c0_13 = arith.constant 0 : index
    %17 = vector.load %arg6[%c0_12, %c0_13] : memref<256x512xbf16, #tpu.memory_space<vmem>>, vector<256x512xbf16>
    %cst_14 = arith.constant dense<0.000000e+00> : vector<16x512xf32>
    %18 = tpu.matmul %16, %17, %cst_14 {dimension_numbers = #tpu.dot_dimension_numbers<[1], [0], [0], [1], [0, 0, 1, 1], [], []>} : vector<16x256xbf16>, vector<256x512xbf16>, vector<16x512xf32> -> vector<16x512xf32>
    %c0_15 = arith.constant 0 : index
    %c0_16 = arith.constant 0 : index
    %19 = vector.load %arg7[%c0_15, %c0_16] : memref<1x512xf32, #tpu.memory_space<vmem>>, vector<1x512xf32>
    %20 = vector.broadcast %19 : vector<1x512xf32> to vector<16x512xf32>
    %21 = arith.addf %18, %20 : vector<16x512xf32>
    %cst_17 = arith.constant 0.000000e+00 : f32
    %22 = vector.broadcast %cst_17 : f32 to vector<16x512xf32>
    %23 = arith.maximumf %21, %22 : vector<16x512xf32>
    %24 = arith.truncf %23 : vector<16x512xf32> to vector<16x512xbf16>
    %c0_18 = arith.constant 0 : index
    %c0_19 = arith.constant 0 : index
    %25 = vector.load %arg8[%c0_18, %c0_19] : memref<512x128xbf16, #tpu.memory_space<vmem>>, vector<512x128xbf16>
    %cst_20 = arith.constant dense<0.000000e+00> : vector<16x128xf32>
    %26 = tpu.matmul %24, %25, %cst_20 {dimension_numbers = #tpu.dot_dimension_numbers<[1], [0], [0], [1], [0, 0, 1, 1], [], []>} : vector<16x512xbf16>, vector<512x128xbf16>, vector<16x128xf32> -> vector<16x128xf32>
    %c0_21 = arith.constant 0 : index
    %c0_22 = arith.constant 0 : index
    %27 = vector.load %arg9[%c0_21, %c0_22] : memref<1x128xf32, #tpu.memory_space<vmem>>, vector<1x128xf32>
    %28 = vector.broadcast %27 : vector<1x128xf32> to vector<16x128xf32>
    %29 = arith.addf %26, %28 : vector<16x128xf32>
    %cst_23 = arith.constant 0.000000e+00 : f32
    %30 = vector.broadcast %cst_23 : f32 to vector<16x128xf32>
    %31 = arith.maximumf %29, %30 : vector<16x128xf32>
    %32 = arith.truncf %31 : vector<16x128xf32> to vector<16x128xbf16>
    %c0_24 = arith.constant 0 : index
    %c0_25 = arith.constant 0 : index
    %33 = vector.load %arg10[%c0_24, %c0_25] : memref<128x128xbf16, #tpu.memory_space<vmem>>, vector<128x128xbf16>
    %cst_26 = arith.constant dense<0.000000e+00> : vector<16x128xf32>
    %34 = tpu.matmul %32, %33, %cst_26 {dimension_numbers = #tpu.dot_dimension_numbers<[1], [0], [0], [1], [0, 0, 1, 1], [], []>} : vector<16x128xbf16>, vector<128x128xbf16>, vector<16x128xf32> -> vector<16x128xf32>
    %c0_27 = arith.constant 0 : index
    %c0_28 = arith.constant 0 : index
    %35 = vector.load %arg11[%c0_27, %c0_28] : memref<1x128xf32, #tpu.memory_space<vmem>>, vector<1x128xf32>
    %36 = vector.broadcast %35 : vector<1x128xf32> to vector<16x128xf32>
    %37 = arith.addf %34, %36 : vector<16x128xf32>
    %38 = math.tanh %37 : vector<16x128xf32>
    %c0_29 = arith.constant 0 : index
    %c0_30 = arith.constant 0 : index
    %39 = vector.load %arg12[%c0_29, %c0_30] : memref<16x128xf32, #tpu.memory_space<vmem>>, vector<16x128xf32>
    tpu.vector_store %arg12[%c0_29, %c0_30], %38 {strides = array<i32>} : memref<16x128xf32, #tpu.memory_space<vmem>>, vector<16x128xf32>,
    return
  }
  func.func @transform_0(%arg0: i32) -> (i32, i32) {
    %c0_i32 = arith.constant 0 : i32
    %c0_i32_0 = arith.constant 0 : i32
    return %arg0, %c0_i32 : i32, i32
  }
  func.func @transform_1(%arg0: i32) -> (i32, i32) {
    %c0_i32 = arith.constant 0 : i32
    %c0_i32_0 = arith.constant 0 : i32
    %c0_i32_1 = arith.constant 0 : i32
    return %c0_i32, %c0_i32_0 : i32, i32
  }
  func.func @transform_2(%arg0: i32) -> (i32, i32) {
    %c0_i32 = arith.constant 0 : i32
    %c0_i32_0 = arith.constant 0 : i32
    %c0_i32_1 = arith.constant 0 : i32
    return %c0_i32, %c0_i32_0 : i32, i32
  }
  func.func @transform_3(%arg0: i32) -> (i32, i32) {
    %c0_i32 = arith.constant 0 : i32
    %c0_i32_0 = arith.constant 0 : i32
    %c0_i32_1 = arith.constant 0 : i32
    return %c0_i32, %c0_i32_0 : i32, i32
  }
  func.func @transform_4(%arg0: i32) -> (i32, i32) {
    %c0_i32 = arith.constant 0 : i32
    %c0_i32_0 = arith.constant 0 : i32
    %c0_i32_1 = arith.constant 0 : i32
    return %c0_i32, %c0_i32_0 : i32, i32
  }
  func.func @transform_5(%arg0: i32) -> (i32, i32) {
    %c0_i32 = arith.constant 0 : i32
    %c0_i32_0 = arith.constant 0 : i32
    %c0_i32_1 = arith.constant 0 : i32
    return %c0_i32, %c0_i32_0 : i32, i32
  }
  func.func @transform_6(%arg0: i32) -> (i32, i32) {
    %c0_i32 = arith.constant 0 : i32
    %c0_i32_0 = arith.constant 0 : i32
    %c0_i32_1 = arith.constant 0 : i32
    return %c0_i32, %c0_i32_0 : i32, i32
  }
  func.func @transform_7(%arg0: i32) -> (i32, i32) {
    %c0_i32 = arith.constant 0 : i32
    %c0_i32_0 = arith.constant 0 : i32
    %c0_i32_1 = arith.constant 0 : i32
    return %c0_i32, %c0_i32_0 : i32, i32
  }
  func.func @transform_8(%arg0: i32) -> (i32, i32) {
    %c0_i32 = arith.constant 0 : i32
    %c0_i32_0 = arith.constant 0 : i32
    %c0_i32_1 = arith.constant 0 : i32
    return %c0_i32, %c0_i32_0 : i32, i32
  }
  func.func @transform_9(%arg0: i32) -> (i32, i32) {
    %c0_i32 = arith.constant 0 : i32
    %c0_i32_0 = arith.constant 0 : i32
    %c0_i32_1 = arith.constant 0 : i32
    return %c0_i32, %c0_i32_0 : i32, i32
  }
  func.func @transform_10(%arg0: i32) -> (i32, i32) {
    %c0_i32 = arith.constant 0 : i32
    %c0_i32_0 = arith.constant 0 : i32
    %c0_i32_1 = arith.constant 0 : i32
    return %c0_i32, %c0_i32_0 : i32, i32
  }
  func.func @transform_11(%arg0: i32) -> (i32, i32) {
    %c0_i32 = arith.constant 0 : i32
    %c0_i32_0 = arith.constant 0 : i32
    return %arg0, %c0_i32 : i32, i32
  }
}

</mosaic_0001>

<llo_original>
// kernel: torch_model_forward.1
$region0: #{torch_model_forward.1}
  #allocation0 [shape = 'u32[]', space=smem, size = 0x4, offset = 0x4, fixed_abs, tag = 'smem constant byte address 0x4 - core index']
  #allocation1 [shape = 'u32[144,128]{1,0:T(1,128)}', space=vmem, size = 0x12000, scoped, tag = 'internal scratch']
  %s0 = inlined_call_operand.vmem [shape: bf16[16,1200], index: 0, kind: input, shape index: {}]
  %s1 = inlined_call_operand.hbm [shape: bf16[1200,128], index: 1, kind: input, shape index: {}]
  %s2 = inlined_call_operand.vmem [shape: f32[1,128], index: 2, kind: input, shape index: {}]
  %s3 = inlined_call_operand.vmem [shape: bf16[128,256], index: 3, kind: input, shape index: {}]
  %s4 = inlined_call_operand.vmem [shape: f32[1,256], index: 4, kind: input, shape index: {}]
  %s5 = inlined_call_operand.hbm [shape: bf16[256,512], index: 5, kind: input, shape index: {}]
  %s6 = inlined_call_operand.vmem [shape: f32[1,512], index: 6, kind: input, shape index: {}]
  %s7 = inlined_call_operand.hbm [shape: bf16[512,128], index: 7, kind: input, shape index: {}]
  %s8 = inlined_call_operand.vmem [shape: f32[1,128], index: 8, kind: input, shape index: {}]
  %s9 = inlined_call_operand.vmem [shape: bf16[128,128], index: 9, kind: input, shape index: {}]
  %s10 = inlined_call_operand.vmem [shape: f32[1,128], index: 10, kind: input, shape index: {}]
  %s11 = inlined_call_operand.vmem [shape: f32[16,128], index: 11, kind: output, shape index: {}]
  %s12 = sld [smem:[#allocation0]]
  $region66: #{torch_model_forward.1} parent=0
    _
  %s14 = ssub.s32 1, %s12
  %s15 = scalar_select 0, %s14, %s12
  $region1: #{torch_model_forward.1} parent=0
    #allocation2 [shape = 'u8[307200]{0}', space=vmem, size = 0x4b000, scoped, tag = 'input window, operand 1, single buffered']
    #allocation3 [shape = 's32[1]{0}', space=sflag, size = 0x4, scoped, tag = 'scoped memory for torch_model_forward.1']
    #allocation4 [shape = 'u8[262144]{0}', space=vmem, size = 0x40000, scoped, tag = 'input window, operand 5, single buffered']
    #allocation5 [shape = 's32[1]{0}', space=sflag, size = 0x4, scoped, tag = 'scoped memory for torch_model_forward.1']
    #allocation6 [shape = 'u8[131072]{0}', space=vmem, size = 0x20000, scoped, tag = 'input window, operand 7, single buffered']
    %16 = vsyncpa [#allocation3], 0
    %17 = vsyncpa [#allocation5], 0
    // Predicated region
    $region2: #{torch_model_forward.1} parent=1 // pred_check
      _
    $region3: #{torch_model_forward.1} parent=1 // pred_check_branch
      %19 = sbr.rel (0) target = $region5
    $region4: #{torch_model_forward.1} parent=1 // pred_region
      _
    $region5: #{torch_model_forward.1} parent=1 // pred_fallthru
      _
    // Predicated region
    $region6: #{torch_model_forward.1} parent=1 // pred_check
      _
    $region7: #{torch_model_forward.1} parent=1 // pred_check_branch
      %21 = sbr.rel (0) target = $region9
    $region8: #{torch_model_forward.1} parent=1 // pred_region
      %s23 = ssub.s32 9600, 9600
      %24 = vsyncadd [#allocation3], %s23
      %s25 = sshll.u32 [#allocation2], 4
      %s26 = int_to_ptr.vmem [resolvable:$true] %s25
      %31 = dma.hbm_to_vmem [thread:$0]  %s1, 9600, %s26, [#allocation3], 64, 64, 4
    $region9: #{torch_model_forward.1} parent=1 // pred_fallthru
      _
    // Predicated region
    $region10: #{torch_model_forward.1} parent=1 // pred_check
      _
    $region11: #{torch_model_forward.1} parent=1 // pred_check_branch
      %33 = sbr.rel (0) target = $region13
    $region12: #{torch_model_forward.1} parent=1 // pred_region
      _
    $region13: #{torch_model_forward.1} parent=1 // pred_fallthru
      _
    // Predicated region
    $region14: #{torch_model_forward.1} parent=1 // pred_check
      _
    $region15: #{torch_model_forward.1} parent=1 // pred_check_branch
      %35 = sbr.rel (0) target = $region17
    $region16: #{torch_model_forward.1} parent=1 // pred_region
      _
    $region17: #{torch_model_forward.1} parent=1 // pred_fallthru
      _
    // Predicated region
    $region18: #{torch_model_forward.1} parent=1 // pred_check
      _
    $region19: #{torch_model_forward.1} parent=1 // pred_check_branch
      %37 = sbr.rel (0) target = $region21
    $region20: #{torch_model_forward.1} parent=1 // pred_region
      _
    $region21: #{torch_model_forward.1} parent=1 // pred_fallthru
      _
    // Predicated region
    $region22: #{torch_model_forward.1} parent=1 // pred_check
      _
    $region23: #{torch_model_forward.1} parent=1 // pred_check_branch
      %39 = sbr.rel (0) target = $region25
    $region24: #{torch_model_forward.1} parent=1 // pred_region
      %s41 = ssub.s32 8192, 8192
      %42 = vsyncadd [#allocation5], %s41
      %s43 = sshll.u32 [#allocation4], 4
      %s44 = int_to_ptr.vmem [resolvable:$true] %s43
      %49 = dma.hbm_to_vmem [thread:$0]  %s5, 8192, %s44, [#allocation5], 256, 256, 16
    $region25: #{torch_model_forward.1} parent=1 // pred_fallthru
      _
    // Predicated region
    $region26: #{torch_model_forward.1} parent=1 // pred_check
      _
    $region27: #{torch_model_forward.1} parent=1 // pred_check_branch
      %51 = sbr.rel (0) target = $region29
    $region28: #{torch_model_forward.1} parent=1 // pred_region
      _
    $region29: #{torch_model_forward.1} parent=1 // pred_fallthru
      _
    // Predicated region
    $region30: #{torch_model_forward.1} parent=1 // pred_check
      _
    $region31: #{torch_model_forward.1} parent=1 // pred_check_branch
      %53 = sbr.rel (0) target = $region33
    $region32: #{torch_model_forward.1} parent=1 // pred_region
      %s55 = ssub.s32 4096, 4096
      %56 = vsyncadd [#allocation5], %s55
      %s57 = sshll.u32 [#allocation6], 4
      %s58 = int_to_ptr.vmem [resolvable:$true] %s57
      %63 = dma.hbm_to_vmem [thread:$0]  %s7, 4096, %s58, [#allocation5], 64, 64, 4
    $region33: #{torch_model_forward.1} parent=1 // pred_fallthru
      _
    // Predicated region
    $region34: #{torch_model_forward.1} parent=1 // pred_check
      _
    $region35: #{torch_model_forward.1} parent=1 // pred_check_branch
      %65 = sbr.rel (0) target = $region37
    $region36: #{torch_model_forward.1} parent=1 // pred_region
      _
    $region37: #{torch_model_forward.1} parent=1 // pred_fallthru
      _
    // Predicated region
    $region38: #{torch_model_forward.1} parent=1 // pred_check
      _
    $region39: #{torch_model_forward.1} parent=1 // pred_check_branch
      %67 = sbr.rel (0) target = $region41
    $region40: #{torch_model_forward.1} parent=1 // pred_region
      _
    $region41: #{torch_model_forward.1} parent=1 // pred_fallthru
      _
    // Predicated region
    $region42: #{torch_model_forward.1} parent=1 // pred_check
      _
    $region43: #{torch_model_forward.1} parent=1 // pred_check_branch
      %69 = sbr.rel (0) target = $region45
    $region44: #{torch_model_forward.1} parent=1 // pred_region
      _
    $region45: #{torch_model_forward.1} parent=1 // pred_fallthru
      _
    // Predicated region
    $region46: #{torch_model_forward.1} parent=1 // pred_check
      _
    $region47: #{torch_model_forward.1} parent=1 // pred_check_branch
      %71 = sbr.rel (0) target = $region49
    $region48: #{torch_model_forward.1} parent=1 // pred_region
      %72 = dma.done [#allocation3], 9600
    $region49: #{torch_model_forward.1} parent=1 // pred_fallthru
      _
    // Predicated region
    $region50: #{torch_model_forward.1} parent=1 // pred_check
      _
    $region51: #{torch_model_forward.1} parent=1 // pred_check_branch
      %74 = sbr.rel (0) target = $region53
    $region52: #{torch_model_forward.1} parent=1 // pred_region
      %75 = dma.done [#allocation5], 8192
    $region53: #{torch_model_forward.1} parent=1 // pred_fallthru
      _
    // Predicated region
    $region54: #{torch_model_forward.1} parent=1 // pred_check
      _
    $region55: #{torch_model_forward.1} parent=1 // pred_check_branch
      %77 = sbr.rel (0) target = $region57
    $region56: #{torch_model_forward.1} parent=1 // pred_region
      %78 = dma.done [#allocation5], 4096
    $region57: #{torch_model_forward.1} parent=1 // pred_fallthru
      _
    %v80 = vld [vmem:[%s0] sm:$0xff]
    %v81 = vld [vmem:[%s0 + $0x8] sm:$0xff]
    %v82 = vld [vmem:[%s0 + $0x10] sm:$0xff]
    %v83 = vld [vmem:[%s0 + $0x18] sm:$0xff]
    %v84 = vld [vmem:[%s0 + $0x20] sm:$0xff]
    %v85 = vld [vmem:[%s0 + $0x28] sm:$0xff]
    %v86 = vld [vmem:[%s0 + $0x30] sm:$0xff]
    %v87 = vld [vmem:[%s0 + $0x38] sm:$0xff]
    %v88 = vld [vmem:[%s0 + $0x40] sm:$0xff]
    %v89 = vld [vmem:[%s0 + $0x48] sm:$0xff]
    %v90 = vld [vmem:[#allocation2] sm:$0xf]
    %v91 = vld [vmem:[#allocation2 + $0x4] sm:$0xf]
    %v92 = vld [vmem:[#allocation2 + $0x8] sm:$0xf]
    %v93 = vld [vmem:[#allocation2 + $0xc] sm:$0xf]
    %v94 = vld [vmem:[#allocation2 + $0x10] sm:$0xf]
    %v95 = vld [vmem:[#allocation2 + $0x14] sm:$0xf]
    %v96 = vld [vmem:[#allocation2 + $0x18] sm:$0xf]
    %v97 = vld [vmem:[#allocation2 + $0x1c] sm:$0xf]
    %v98 = vld [vmem:[#allocation2 + $0x20] sm:$0xf]
    %v99 = vld [vmem:[#allocation2 + $0x24] sm:$0xf]
    %v100 = vld [vmem:[#allocation2 + $0x28] sm:$0xf]
    %v101 = vld [vmem:[#allocation2 + $0x2c] sm:$0xf]
    %v102 = vld [vmem:[#allocation2 + $0x30] sm:$0xf]
    %v103 = vld [vmem:[#allocation2 + $0x34] sm:$0xf]
    %v104 = vld [vmem:[#allocation2 + $0x38] sm:$0xf]
    %v105 = vld [vmem:[#allocation2 + $0x3c] sm:$0xf]
    %v106 = vld [vmem:[#allocation2 + $0x40] sm:$0xf]
    %v107 = vld [vmem:[#allocation2 + $0x44] sm:$0xf]
    %v108 = vld [vmem:[#allocation2 + $0x48] sm:$0xf]
    %v109 = vld [vmem:[#allocation2 + $0x4c] sm:$0xf]
    %v110 = vld [vmem:[#allocation2 + $0x50] sm:$0xf]
    %v111 = vld [vmem:[#allocation2 + $0x54] sm:$0xf]
    %v112 = vld [vmem:[#allocation2 + $0x58] sm:$0xf]
    %v113 = vld [vmem:[#allocation2 + $0x5c] sm:$0xf]
    %v114 = vld [vmem:[#allocation2 + $0x60] sm:$0xf]
    %v115 = vld [vmem:[#allocation2 + $0x64] sm:$0xf]
    %v116 = vld [vmem:[#allocation2 + $0x68] sm:$0xf]
    %v117 = vld [vmem:[#allocation2 + $0x6c] sm:$0xf]
    %v118 = vld [vmem:[#allocation2 + $0x70] sm:$0xf]
    %v119 = vld [vmem:[#allocation2 + $0x74] sm:$0xf]
    %v120 = vld [vmem:[#allocation2 + $0x78] sm:$0xf]
    %v121 = vld [vmem:[#allocation2 + $0x7c] sm:$0xf]
    %v122 = vld [vmem:[#allocation2 + $0x80] sm:$0xf]
    %v123 = vld [vmem:[#allocation2 + $0x84] sm:$0xf]
    %v124 = vld [vmem:[#allocation2 + $0x88] sm:$0xf]
    %v125 = vld [vmem:[#allocation2 + $0x8c] sm:$0xf]
    %v126 = vld [vmem:[#allocation2 + $0x90] sm:$0xf]
    %v127 = vld [vmem:[#allocation2 + $0x94] sm:$0xf]
    %v128 = vld [vmem:[#allocation2 + $0x98] sm:$0xf]
    %v129 = vld [vmem:[#allocation2 + $0x9c] sm:$0xf]
    %v130 = vld [vmem:[#allocation2 + $0xa0] sm:$0xf]
    %v131 = vld [vmem:[#allocation2 + $0xa4] sm:$0xf]
    %v132 = vld [vmem:[#allocation2 + $0xa8] sm:$0xf]
    %v133 = vld [vmem:[#allocation2 + $0xac] sm:$0xf]
    %v134 = vld [vmem:[#allocation2 + $0xb0] sm:$0xf]
    %v135 = vld [vmem:[#allocation2 + $0xb4] sm:$0xf]
    %v136 = vld [vmem:[#allocation2 + $0xb8] sm:$0xf]
    %v137 = vld [vmem:[#allocation2 + $0xbc] sm:$0xf]
    %v138 = vld [vmem:[#allocation2 + $0xc0] sm:$0xf]
    %v139 = vld [vmem:[#allocation2 + $0xc4] sm:$0xf]
    %v140 = vld [vmem:[#allocation2 + $0xc8] sm:$0xf]
    %v141 = vld [vmem:[#allocation2 + $0xcc] sm:$0xf]
    %v142 = vld [vmem:[#allocation2 + $0xd0] sm:$0xf]
    %v143 = vld [vmem:[#allocation2 + $0xd4] sm:$0xf]
    %v144 = vld [vmem:[#allocation2 + $0xd8] sm:$0xf]
    %v145 = vld [vmem:[#allocation2 + $0xdc] sm:$0xf]
    %v146 = vld [vmem:[#allocation2 + $0xe0] sm:$0xf]
    %v147 = vld [vmem:[#allocation2 + $0xe4] sm:$0xf]
    %v148 = vld [vmem:[#allocation2 + $0xe8] sm:$0xf]
    %v149 = vld [vmem:[#allocation2 + $0xec] sm:$0xf]
    %v150 = vld [vmem:[#allocation2 + $0xf0] sm:$0xf]
    %v151 = vld [vmem:[#allocation2 + $0xf4] sm:$0xf]
    %v152 = vld [vmem:[#allocation2 + $0xf8] sm:$0xf]
    %v153 = vld [vmem:[#allocation2 + $0xfc] sm:$0xf]
    %v154 = vld [vmem:[#allocation2 + $0x100] sm:$0xf]
    %v155 = vld [vmem:[#allocation2 + $0x104] sm:$0xf]
    %v156 = vld [vmem:[#allocation2 + $0x108] sm:$0xf]
    %v157 = vld [vmem:[#allocation2 + $0x10c] sm:$0xf]
    %v158 = vld [vmem:[#allocation2 + $0x110] sm:$0xf]
    %v159 = vld [vmem:[#allocation2 + $0x114] sm:$0xf]
    %v160 = vld [vmem:[#allocation2 + $0x118] sm:$0xf]
    %v161 = vld [vmem:[#allocation2 + $0x11c] sm:$0xf]
    %v162 = vld [vmem:[#allocation2 + $0x120] sm:$0xf]
    %v163 = vld [vmem:[#allocation2 + $0x124] sm:$0xf]
    %v164 = vld [vmem:[#allocation2 + $0x128] sm:$0xf]
    %v165 = vld [vmem:[#allocation2 + $0x12c] sm:$0xf]
    %v166 = vld [vmem:[#allocation2 + $0x130] sm:$0xf]
    %v167 = vld [vmem:[#allocation2 + $0x134] sm:$0xf]
    %v168 = vld [vmem:[#allocation2 + $0x138] sm:$0xf]
    %v169 = vld [vmem:[#allocation2 + $0x13c] sm:$0xf]
    %v170 = vld [vmem:[#allocation2 + $0x140] sm:$0xf]
    %v171 = vld [vmem:[#allocation2 + $0x144] sm:$0xf]
    %v172 = vld [vmem:[#allocation2 + $0x148] sm:$0xf]
    %v173 = vld [vmem:[#allocation2 + $0x14c] sm:$0xf]
    %v174 = vld [vmem:[#allocation2 + $0x150] sm:$0xf]
    %v175 = vld [vmem:[#allocation2 + $0x154] sm:$0xf]
    %v176 = vld [vmem:[#allocation2 + $0x158] sm:$0xf]
    %v177 = vld [vmem:[#allocation2 + $0x15c] sm:$0xf]
    %v178 = vld [vmem:[#allocation2 + $0x160] sm:$0xf]
    %v179 = vld [vmem:[#allocation2 + $0x164] sm:$0xf]
    %v180 = vld [vmem:[#allocation2 + $0x168] sm:$0xf]
    %v181 = vld [vmem:[#allocation2 + $0x16c] sm:$0xf]
    %v182 = vld [vmem:[#allocation2 + $0x170] sm:$0xf]
    %v183 = vld [vmem:[#allocation2 + $0x174] sm:$0xf]
    %v184 = vld [vmem:[#allocation2 + $0x178] sm:$0xf]
    %v185 = vld [vmem:[#allocation2 + $0x17c] sm:$0xf]
    %v186 = vld [vmem:[#allocation2 + $0x180] sm:$0xf]
    %v187 = vld [vmem:[#allocation2 + $0x184] sm:$0xf]
    %v188 = vld [vmem:[#allocation2 + $0x188] sm:$0xf]
    %v189 = vld [vmem:[#allocation2 + $0x18c] sm:$0xf]
    %v190 = vld [vmem:[#allocation2 + $0x190] sm:$0xf]
    %v191 = vld [vmem:[#allocation2 + $0x194] sm:$0xf]
    %v192 = vld [vmem:[#allocation2 + $0x198] sm:$0xf]
    %v193 = vld [vmem:[#allocation2 + $0x19c] sm:$0xf]
    %v194 = vld [vmem:[#allocation2 + $0x1a0] sm:$0xf]
    %v195 = vld [vmem:[#allocation2 + $0x1a4] sm:$0xf]
    %v196 = vld [vmem:[#allocation2 + $0x1a8] sm:$0xf]
    %v197 = vld [vmem:[#allocation2 + $0x1ac] sm:$0xf]
    %v198 = vld [vmem:[#allocation2 + $0x1b0] sm:$0xf]
    %v199 = vld [vmem:[#allocation2 + $0x1b4] sm:$0xf]
    %v200 = vld [vmem:[#allocation2 + $0x1b8] sm:$0xf]
    %v201 = vld [vmem:[#allocation2 + $0x1bc] sm:$0xf]
    %v202 = vld [vmem:[#allocation2 + $0x1c0] sm:$0xf]
    %v203 = vld [vmem:[#allocation2 + $0x1c4] sm:$0xf]
    %v204 = vld [vmem:[#allocation2 + $0x1c8] sm:$0xf]
    %v205 = vld [vmem:[#allocation2 + $0x1cc] sm:$0xf]
    %v206 = vld [vmem:[#allocation2 + $0x1d0] sm:$0xf]
    %v207 = vld [vmem:[#allocation2 + $0x1d4] sm:$0xf]
    %v208 = vld [vmem:[#allocation2 + $0x1d8] sm:$0xf]
    %v209 = vld [vmem:[#allocation2 + $0x1dc] sm:$0xf]
    %v210 = vld [vmem:[#allocation2 + $0x1e0] sm:$0xf]
    %v211 = vld [vmem:[#allocation2 + $0x1e4] sm:$0xf]
    %v212 = vld [vmem:[#allocation2 + $0x1e8] sm:$0xf]
    %v213 = vld [vmem:[#allocation2 + $0x1ec] sm:$0xf]
    %v214 = vld [vmem:[#allocation2 + $0x1f0] sm:$0xf]
    %v215 = vld [vmem:[#allocation2 + $0x1f4] sm:$0xf]
    %v216 = vld [vmem:[#allocation2 + $0x1f8] sm:$0xf]
    %v217 = vld [vmem:[#allocation2 + $0x1fc] sm:$0xf]
    %v218 = vld [vmem:[#allocation2 + $0x200] sm:$0xf]
    %v219 = vld [vmem:[#allocation2 + $0x204] sm:$0xf]
    %v220 = vld [vmem:[#allocation2 + $0x208] sm:$0xf]
    %v221 = vld [vmem:[#allocation2 + $0x20c] sm:$0xf]
    %v222 = vld [vmem:[#allocation2 + $0x210] sm:$0xf]
    %v223 = vld [vmem:[#allocation2 + $0x214] sm:$0xf]
    %v224 = vld [vmem:[#allocation2 + $0x218] sm:$0xf]
    %v225 = vld [vmem:[#allocation2 + $0x21c] sm:$0xf]
    %v226 = vld [vmem:[#allocation2 + $0x220] sm:$0xf]
    %v227 = vld [vmem:[#allocation2 + $0x224] sm:$0xf]
    %v228 = vld [vmem:[#allocation2 + $0x228] sm:$0xf]
    %v229 = vld [vmem:[#allocation2 + $0x22c] sm:$0xf]
    %v230 = vld [vmem:[#allocation2 + $0x230] sm:$0xf]
    %v231 = vld [vmem:[#allocation2 + $0x234] sm:$0xf]
    %v232 = vld [vmem:[#allocation2 + $0x238] sm:$0xf]
    %v233 = vld [vmem:[#allocation2 + $0x23c] sm:$0xf]
    %v234 = vld [vmem:[#allocation2 + $0x240] sm:$0xf]
    %v235 = vld [vmem:[#allocation2 + $0x244] sm:$0xf]
    %v236 = vld [vmem:[#allocation2 + $0x248] sm:$0xf]
    %v237 = vld [vmem:[#allocation2 + $0x24c] sm:$0xf]
    %v238 = vld [vmem:[#allocation2 + $0x250] sm:$0xf]
    %v239 = vld [vmem:[#allocation2 + $0x254] sm:$0xf]
    %v240 = vld [vmem:[%s2] sm:$0x1]
    %v242 = vlaneseq
    %v243 = vshrl.u32 %v242, 7
    %v244 = vsub.s32 0, %v243
    %v245 = vrot.slane %v240, %v244
    %v257 = vunpack.c.l.b16 %v80
    %v258 = vunpack.c.h.b16 %v80
    %v259 = vunpack.c.l.b16 %v81
    %v260 = vunpack.c.h.b16 %v81
    %v261 = vunpack.c.l.b16 %v82
    %v262 = vunpack.c.h.b16 %v82
    %v263 = vunpack.c.l.b16 %v83
    %v264 = vunpack.c.h.b16 %v83
    %v265 = vunpack.c.l.b16 %v84
    %v266 = vunpack.c.h.b16 %v84
    %v267 = vunpack.c.l.b16 %v85
    %v268 = vunpack.c.h.b16 %v85
    %v269 = vunpack.c.l.b16 %v86
    %v270 = vunpack.c.h.b16 %v86
    %v271 = vunpack.c.l.b16 %v87
    %v272 = vunpack.c.h.b16 %v87
    %v273 = vunpack.c.l.b16 %v88
    %v274 = vunpack.c.h.b16 %v88
    %v275 = vunpack.c.l.b16 %v89
    %v276 = vunpack.c.h.b16 %v89
    %v277 = vpack.c.b16 %v267, %v257
    %v278 = vpack.c.b16 %v268, %v258
    %v279 = vpack.c.b16 %v269, %v259
    %v280 = vpack.c.b16 %v270, %v260
    %v281 = vpack.c.b16 %v271, %v261
    %v282 = vpack.c.b16 %v272, %v262
    %v283 = vpack.c.b16 %v273, %v263
    %v284 = vpack.c.b16 %v274, %v264
    %v285 = vpack.c.b16 %v275, %v265
    %v286 = vpack.c.b16 %v276, %v266
    %v446 = vunpack.c.l.b16 %v90
    %v447 = vunpack.c.l.b16 %v91
    %v448 = vunpack.c.l.b16 %v92
    %v449 = vunpack.c.l.b16 %v93
    %v450 = vunpack.c.l.b16 %v94
    %v451 = vunpack.c.l.b16 %v95
    %v452 = vunpack.c.l.b16 %v96
    %v453 = vunpack.c.l.b16 %v97
    %v454 = vunpack.c.l.b16 %v98
    %v455 = vunpack.c.l.b16 %v99
    %v456 = vunpack.c.l.b16 %v100
    %v457 = vunpack.c.l.b16 %v101
    %v458 = vunpack.c.l.b16 %v102
    %v459 = vunpack.c.l.b16 %v103
    %v460 = vunpack.c.l.b16 %v104
    %v461 = vunpack.c.l.b16 %v105
    %v462 = vunpack.c.l.b16 %v106
    %v463 = vunpack.c.l.b16 %v107
    %v464 = vunpack.c.l.b16 %v108
    %v465 = vunpack.c.l.b16 %v109
    %v466 = vunpack.c.l.b16 %v110
    %v467 = vunpack.c.l.b16 %v111
    %v468 = vunpack.c.l.b16 %v112
    %v469 = vunpack.c.l.b16 %v113
    %v470 = vunpack.c.l.b16 %v114
    %v471 = vunpack.c.l.b16 %v115
    %v472 = vunpack.c.l.b16 %v116
    %v473 = vunpack.c.l.b16 %v117
    %v474 = vunpack.c.l.b16 %v118
    %v475 = vunpack.c.l.b16 %v119
    %v476 = vunpack.c.l.b16 %v120
    %v477 = vunpack.c.l.b16 %v121
    %v478 = vunpack.c.l.b16 %v122
    %v479 = vunpack.c.l.b16 %v123
    %v480 = vunpack.c.l.b16 %v124
    %v481 = vunpack.c.l.b16 %v125
    %v482 = vunpack.c.l.b16 %v126
    %v483 = vunpack.c.l.b16 %v127
    %v484 = vunpack.c.l.b16 %v128
    %v485 = vunpack.c.l.b16 %v129
    %v486 = vunpack.c.l.b16 %v130
    %v487 = vunpack.c.l.b16 %v131
    %v488 = vunpack.c.l.b16 %v132
    %v489 = vunpack.c.l.b16 %v133
    %v490 = vunpack.c.l.b16 %v134
    %v491 = vunpack.c.l.b16 %v135
    %v492 = vunpack.c.l.b16 %v136
    %v493 = vunpack.c.l.b16 %v137
    %v494 = vunpack.c.l.b16 %v138
    %v495 = vunpack.c.l.b16 %v139
    %v496 = vunpack.c.l.b16 %v140
    %v497 = vunpack.c.l.b16 %v141
    %v498 = vunpack.c.l.b16 %v142
    %v499 = vunpack.c.l.b16 %v143
    %v500 = vunpack.c.l.b16 %v144
    %v501 = vunpack.c.l.b16 %v145
    %v502 = vunpack.c.l.b16 %v146
    %v503 = vunpack.c.l.b16 %v147
    %v504 = vunpack.c.l.b16 %v148
    %v505 = vunpack.c.l.b16 %v149
    %v506 = vunpack.c.l.b16 %v150
    %v507 = vunpack.c.l.b16 %v151
    %v508 = vunpack.c.l.b16 %v152
    %v509 = vunpack.c.l.b16 %v153
    %v510 = vunpack.c.l.b16 %v154
    %v511 = vunpack.c.l.b16 %v155
    %v512 = vunpack.c.l.b16 %v156
    %v513 = vunpack.c.l.b16 %v157
    %v514 = vunpack.c.l.b16 %v158
    %v515 = vunpack.c.l.b16 %v159
    %v516 = vunpack.c.l.b16 %v160
    %v517 = vunpack.c.l.b16 %v161
    %v518 = vunpack.c.l.b16 %v162
    %v519 = vunpack.c.l.b16 %v163
    %v520 = vunpack.c.l.b16 %v164
    %v521 = vunpack.c.l.b16 %v165
    %v522 = vunpack.c.l.b16 %v166
    %v523 = vunpack.c.l.b16 %v167
    %v524 = vunpack.c.l.b16 %v168
    %v525 = vunpack.c.l.b16 %v169
    %v526 = vunpack.c.l.b16 %v170
    %v527 = vunpack.c.l.b16 %v171
    %v528 = vunpack.c.l.b16 %v172
    %v529 = vunpack.c.l.b16 %v173
    %v530 = vunpack.c.l.b16 %v174
    %v531 = vunpack.c.l.b16 %v175
    %v532 = vunpack.c.l.b16 %v176
    %v533 = vunpack.c.l.b16 %v177
    %v534 = vunpack.c.l.b16 %v178
    %v535 = vunpack.c.l.b16 %v179
    %v536 = vunpack.c.l.b16 %v180
    %v537 = vunpack.c.l.b16 %v181
    %v538 = vunpack.c.l.b16 %v182
    %v539 = vunpack.c.l.b16 %v183
    %v540 = vunpack.c.l.b16 %v184
    %v541 = vunpack.c.l.b16 %v185
    %v542 = vunpack.c.l.b16 %v186
    %v543 = vunpack.c.l.b16 %v187
    %v544 = vunpack.c.l.b16 %v188
    %v545 = vunpack.c.l.b16 %v189
    %v546 = vunpack.c.l.b16 %v190
    %v547 = vunpack.c.l.b16 %v191
    %v548 = vunpack.c.l.b16 %v192
    %v549 = vunpack.c.l.b16 %v193
    %v550 = vunpack.c.l.b16 %v194
    %v551 = vunpack.c.l.b16 %v195
    %v552 = vunpack.c.l.b16 %v196
    %v553 = vunpack.c.l.b16 %v197
    %v554 = vunpack.c.l.b16 %v198
    %v555 = vunpack.c.l.b16 %v199
    %v556 = vunpack.c.l.b16 %v200
    %v557 = vunpack.c.l.b16 %v201
    %v558 = vunpack.c.l.b16 %v202
    %v559 = vunpack.c.l.b16 %v203
    %v560 = vunpack.c.l.b16 %v204
    %v561 = vunpack.c.l.b16 %v205
    %v562 = vunpack.c.l.b16 %v206
    %v563 = vunpack.c.l.b16 %v207
    %v564 = vunpack.c.l.b16 %v208
    %v565 = vunpack.c.l.b16 %v209
    %v566 = vunpack.c.l.b16 %v210
    %v567 = vunpack.c.l.b16 %v211
    %v568 = vunpack.c.l.b16 %v212
    %v569 = vunpack.c.l.b16 %v213
    %v570 = vunpack.c.l.b16 %v214
    %v571 = vunpack.c.l.b16 %v215
    %v572 = vunpack.c.l.b16 %v216
    %v573 = vunpack.c.l.b16 %v217
    %v574 = vunpack.c.l.b16 %v218
    %v575 = vunpack.c.l.b16 %v219
    %v576 = vunpack.c.l.b16 %v220
    %v577 = vunpack.c.l.b16 %v221
    %v578 = vunpack.c.l.b16 %v222
    %v579 = vunpack.c.l.b16 %v223
    %v580 = vunpack.c.l.b16 %v224
    %v581 = vunpack.c.l.b16 %v225
    %v582 = vunpack.c.l.b16 %v226
    %v583 = vunpack.c.l.b16 %v227
    %v584 = vunpack.c.l.b16 %v228
    %v585 = vunpack.c.l.b16 %v229
    %v586 = vunpack.c.l.b16 %v230
    %v587 = vunpack.c.l.b16 %v231
    %v588 = vunpack.c.l.b16 %v232
    %v589 = vunpack.c.l.b16 %v233
    %v590 = vunpack.c.l.b16 %v234
    %v591 = vunpack.c.l.b16 %v235
    %v592 = vunpack.c.l.b16 %v236
    %v593 = vunpack.c.l.b16 %v237
    %v594 = vunpack.c.l.b16 %v238
    %v595 = vunpack.c.l.b16 %v239
    %v596 = vpack.c.b16 %v447, %v446
    %v597 = vpack.c.b16 %v449, %v448
    %v598 = vpack.c.b16 %v451, %v450
    %v599 = vpack.c.b16 %v453, %v452
    %v600 = vpack.c.b16 %v455, %v454
    %v601 = vpack.c.b16 %v457, %v456
    %v602 = vpack.c.b16 %v459, %v458
    %v603 = vpack.c.b16 %v461, %v460
    %v604 = vpack.c.b16 %v463, %v462
    %v605 = vpack.c.b16 %v465, %v464
    %v606 = vpack.c.b16 %v467, %v466
    %v607 = vpack.c.b16 %v469, %v468
    %v608 = vpack.c.b16 %v471, %v470
    %v609 = vpack.c.b16 %v473, %v472
    %v610 = vpack.c.b16 %v475, %v474
    %v611 = vpack.c.b16 %v477, %v476
    %v612 = vpack.c.b16 %v479, %v478
    %v613 = vpack.c.b16 %v481, %v480
    %v614 = vpack.c.b16 %v483, %v482
    %v615 = vpack.c.b16 %v485, %v484
    %v616 = vpack.c.b16 %v487, %v486
    %v617 = vpack.c.b16 %v489, %v488
    %v618 = vpack.c.b16 %v491, %v490
    %v619 = vpack.c.b16 %v493, %v492
    %v620 = vpack.c.b16 %v495, %v494
    %v621 = vpack.c.b16 %v497, %v496
    %v622 = vpack.c.b16 %v499, %v498
    %v623 = vpack.c.b16 %v501, %v500
    %v624 = vpack.c.b16 %v503, %v502
    %v625 = vpack.c.b16 %v505, %v504
    %v626 = vpack.c.b16 %v507, %v506
    %v627 = vpack.c.b16 %v509, %v508
    %v628 = vpack.c.b16 %v511, %v510
    %v629 = vpack.c.b16 %v513, %v512
    %v630 = vpack.c.b16 %v515, %v514
    %v631 = vpack.c.b16 %v517, %v516
    %v632 = vpack.c.b16 %v519, %v518
    %v633 = vpack.c.b16 %v521, %v520
    %v634 = vpack.c.b16 %v523, %v522
    %v635 = vpack.c.b16 %v525, %v524
    %v636 = vpack.c.b16 %v527, %v526
    %v637 = vpack.c.b16 %v529, %v528
    %v638 = vpack.c.b16 %v531, %v530
    %v639 = vpack.c.b16 %v533, %v532
    %v640 = vpack.c.b16 %v535, %v534
    %v641 = vpack.c.b16 %v537, %v536
    %v642 = vpack.c.b16 %v539, %v538
    %v643 = vpack.c.b16 %v541, %v540
    %v644 = vpack.c.b16 %v543, %v542
    %v645 = vpack.c.b16 %v545, %v544
    %v646 = vpack.c.b16 %v547, %v546
    %v647 = vpack.c.b16 %v549, %v548
    %v648 = vpack.c.b16 %v551, %v550
    %v649 = vpack.c.b16 %v553, %v552
    %v650 = vpack.c.b16 %v555, %v554
    %v651 = vpack.c.b16 %v557, %v556
    %v652 = vpack.c.b16 %v559, %v558
    %v653 = vpack.c.b16 %v561, %v560
    %v654 = vpack.c.b16 %v563, %v562
    %v655 = vpack.c.b16 %v565, %v564
    %v656 = vpack.c.b16 %v567, %v566
    %v657 = vpack.c.b16 %v569, %v568
    %v658 = vpack.c.b16 %v571, %v570
    %v659 = vpack.c.b16 %v573, %v572
    %v660 = vpack.c.b16 %v575, %v574
    %v661 = vpack.c.b16 %v577, %v576
    %v662 = vpack.c.b16 %v579, %v578
    %v663 = vpack.c.b16 %v581, %v580
    %v664 = vpack.c.b16 %v583, %v582
    %v665 = vpack.c.b16 %v585, %v584
    %v666 = vpack.c.b16 %v587, %v586
    %v667 = vpack.c.b16 %v589, %v588
    %v668 = vpack.c.b16 %v591, %v590
    %v669 = vpack.c.b16 %v593, %v592
    %v670 = vpack.c.b16 %v595, %v594
    %vm746 = vcmask 392192
    %v748 = vsel %vm746, %v286, 0
    %750 = vmatprep.subr.bf16.mxu0 0
    %751 = vmatpush1.bf16.msra.mxu0 %v603
    %752 = vmatprep.subr.bf16.mxu0 0
    %753 = vmatpush1.bf16.msra.mxu0 %v602
    %754 = vmatprep.subr.bf16.mxu0 0
    %755 = vmatpush1.bf16.msra.mxu0 %v601
    %756 = vmatprep.subr.bf16.mxu0 0
    %757 = vmatpush1.bf16.msra.mxu0 %v600
    %758 = vmatprep.subr.bf16.mxu0 0
    %759 = vmatpush1.bf16.msra.mxu0 %v599
    %760 = vmatprep.subr.bf16.mxu0 0
    %761 = vmatpush1.bf16.msra.mxu0 %v598
    %762 = vmatprep.subr.bf16.mxu0 0
    %763 = vmatpush1.bf16.msra.mxu0 %v597
    %764 = vmatprep.subr.bf16.mxu0 0
    %765 = vmatpush1.bf16.msra.mxu0 %v596
    %766 = vmatprep.subr.bf16.mxu0 0
    %767 = vmatpush2.bf16.msra.mxu0 %v611
    %768 = vmatprep.subr.bf16.mxu0 0
    %769 = vmatpush2.bf16.msra.mxu0 %v610
    %770 = vmatprep.subr.bf16.mxu0 0
    %771 = vmatpush2.bf16.msra.mxu0 %v609
    %772 = vmatprep.subr.bf16.mxu0 0
    %773 = vmatpush2.bf16.msra.mxu0 %v608
    %774 = vmatprep.subr.bf16.mxu0 0
    %775 = vmatpush2.bf16.msra.mxu0 %v607
    %776 = vmatprep.subr.bf16.mxu0 0
    %777 = vmatpush2.bf16.msra.mxu0 %v606
    %778 = vmatprep.subr.bf16.mxu0 0
    %779 = vmatpush2.bf16.msra.mxu0 %v605
    %780 = vmatprep.subr.bf16.mxu0 0
    %781 = vmatpush2.bf16.msra.mxu0 %v604
    %782 = vmatprep.mubr.bf16.mxu0 %v278
    %783 = vmatmul.mubr.bf16.gmra.mxu0 %v277
    %v784 = vpop.f32.mrf.mxu0
    %v785 = vadd.f32 %v245, %v784
    %v786 = vpop.f32.mrf.mxu0
    %v787 = vpop.f32.mrf.mxu0
    %v788 = vadd.f32 %v245, %v787
    %v789 = vpop.f32.mrf.mxu0
    %790 = vdwg.mxu0
    %791 = vmatprep.subr.bf16.mxu0 0
    %792 = vmatpush1.bf16.msra.mxu0 %v619
    %793 = vmatprep.subr.bf16.mxu0 0
    %794 = vmatpush1.bf16.msra.mxu0 %v618
    %795 = vmatprep.subr.bf16.mxu0 0
    %796 = vmatpush1.bf16.msra.mxu0 %v617
    %797 = vmatprep.subr.bf16.mxu0 0
    %798 = vmatpush1.bf16.msra.mxu0 %v616
    %799 = vmatprep.subr.bf16.mxu0 0
    %800 = vmatpush1.bf16.msra.mxu0 %v615
    %801 = vmatprep.subr.bf16.mxu0 0
    %802 = vmatpush1.bf16.msra.mxu0 %v614
    %803 = vmatprep.subr.bf16.mxu0 0
    %804 = vmatpush1.bf16.msra.mxu0 %v613
    %805 = vmatprep.subr.bf16.mxu0 0
    %806 = vmatpush1.bf16.msra.mxu0 %v612
    %807 = vmatprep.subr.bf16.mxu0 0
    %808 = vmatpush2.bf16.msra.mxu0 %v627
    %809 = vmatprep.subr.bf16.mxu0 0
    %810 = vmatpush2.bf16.msra.mxu0 %v626
    %811 = vmatprep.subr.bf16.mxu0 0
    %812 = vmatpush2.bf16.msra.mxu0 %v625
    %813 = vmatprep.subr.bf16.mxu0 0
    %814 = vmatpush2.bf16.msra.mxu0 %v624
    %815 = vmatprep.subr.bf16.mxu0 0
    %816 = vmatpush2.bf16.msra.mxu0 %v623
    %817 = vmatprep.subr.bf16.mxu0 0
    %818 = vmatpush2.bf16.msra.mxu0 %v622
    %819 = vmatprep.subr.bf16.mxu0 0
    %820 = vmatpush2.bf16.msra.mxu0 %v621
    %821 = vmatprep.subr.bf16.mxu0 0
    %822 = vmatpush2.bf16.msra.mxu0 %v620
    %823 = vmatprep.mubr.bf16.mxu0 %v280
    %824 = vmatmul.mubr.bf16.gmra.mxu0 %v279
    %v825 = vpop.f32.mrf.mxu0
    %v826 = vadd.f32 %v785, %v825
    %v827 = vpop.f32.mrf.mxu0
    %v828 = vpop.f32.mrf.mxu0
    %v829 = vadd.f32 %v788, %v828
    %v830 = vpop.f32.mrf.mxu0
    %831 = vdwg.mxu0
    %832 = vmatprep.subr.bf16.mxu0 0
    %833 = vmatpush1.bf16.msra.mxu0 %v635
    %834 = vmatprep.subr.bf16.mxu0 0
    %835 = vmatpush1.bf16.msra.mxu0 %v634
    %836 = vmatprep.subr.bf16.mxu0 0
    %837 = vmatpush1.bf16.msra.mxu0 %v633
    %838 = vmatprep.subr.bf16.mxu0 0
    %839 = vmatpush1.bf16.msra.mxu0 %v632
    %840 = vmatprep.subr.bf16.mxu0 0
    %841 = vmatpush1.bf16.msra.mxu0 %v631
    %842 = vmatprep.subr.bf16.mxu0 0
    %843 = vmatpush1.bf16.msra.mxu0 %v630
    %844 = vmatprep.subr.bf16.mxu0 0
    %845 = vmatpush1.bf16.msra.mxu0 %v629
    %846 = vmatprep.subr.bf16.mxu0 0
    %847 = vmatpush1.bf16.msra.mxu0 %v628
    %848 = vmatprep.subr.bf16.mxu0 0
    %849 = vmatpush2.bf16.msra.mxu0 %v643
    %850 = vmatprep.subr.bf16.mxu0 0
    %851 = vmatpush2.bf16.msra.mxu0 %v642
    %852 = vmatprep.subr.bf16.mxu0 0
    %853 = vmatpush2.bf16.msra.mxu0 %v641
    %854 = vmatprep.subr.bf16.mxu0 0
    %855 = vmatpush2.bf16.msra.mxu0 %v640
    %856 = vmatprep.subr.bf16.mxu0 0
    %857 = vmatpush2.bf16.msra.mxu0 %v639
    %858 = vmatprep.subr.bf16.mxu0 0
    %859 = vmatpush2.bf16.msra.mxu0 %v638
    %860 = vmatprep.subr.bf16.mxu0 0
    %861 = vmatpush2.bf16.msra.mxu0 %v637
    %862 = vmatprep.subr.bf16.mxu0 0
    %863 = vmatpush2.bf16.msra.mxu0 %v636
    %864 = vmatprep.mubr.bf16.mxu0 %v282
    %865 = vmatmul.mubr.bf16.gmra.mxu0 %v281
    %v866 = vpop.f32.mrf.mxu0
    %v867 = vadd.f32 %v826, %v866
    %v868 = vpop.f32.mrf.mxu0
    %v869 = vpop.f32.mrf.mxu0
    %v870 = vadd.f32 %v829, %v869
    %v871 = vpop.f32.mrf.mxu0
    %872 = vdwg.mxu0
    %873 = vmatprep.subr.bf16.mxu0 0
    %874 = vmatpush1.bf16.msra.mxu0 %v651
    %875 = vmatprep.subr.bf16.mxu0 0
    %876 = vmatpush1.bf16.msra.mxu0 %v650
    %877 = vmatprep.subr.bf16.mxu0 0
    %878 = vmatpush1.bf16.msra.mxu0 %v649
    %879 = vmatprep.subr.bf16.mxu0 0
    %880 = vmatpush1.bf16.msra.mxu0 %v648
    %881 = vmatprep.subr.bf16.mxu0 0
    %882 = vmatpush1.bf16.msra.mxu0 %v647
    %883 = vmatprep.subr.bf16.mxu0 0
    %884 = vmatpush1.bf16.msra.mxu0 %v646
    %885 = vmatprep.subr.bf16.mxu0 0
    %886 = vmatpush1.bf16.msra.mxu0 %v645
    %887 = vmatprep.subr.bf16.mxu0 0
    %888 = vmatpush1.bf16.msra.mxu0 %v644
    %889 = vmatprep.subr.bf16.mxu0 0
    %890 = vmatpush2.bf16.msra.mxu0 %v659
    %891 = vmatprep.subr.bf16.mxu0 0
    %892 = vmatpush2.bf16.msra.mxu0 %v658
    %893 = vmatprep.subr.bf16.mxu0 0
    %894 = vmatpush2.bf16.msra.mxu0 %v657
    %895 = vmatprep.subr.bf16.mxu0 0
    %896 = vmatpush2.bf16.msra.mxu0 %v656
    %897 = vmatprep.subr.bf16.mxu0 0
    %898 = vmatpush2.bf16.msra.mxu0 %v655
    %899 = vmatprep.subr.bf16.mxu0 0
    %900 = vmatpush2.bf16.msra.mxu0 %v654
    %901 = vmatprep.subr.bf16.mxu0 0
    %902 = vmatpush2.bf16.msra.mxu0 %v653
    %903 = vmatprep.subr.bf16.mxu0 0
    %904 = vmatpush2.bf16.msra.mxu0 %v652
    %905 = vmatprep.mubr.bf16.mxu0 %v284
    %906 = vmatmul.mubr.bf16.gmra.mxu0 %v283
    %v907 = vpop.f32.mrf.mxu0
    %v908 = vadd.f32 %v867, %v907
    %v909 = vpop.f32.mrf.mxu0
    %v910 = vpop.f32.mrf.mxu0
    %v911 = vadd.f32 %v870, %v910
    %v912 = vpop.f32.mrf.mxu0
    %913 = vdwg.mxu0
    %914 = vmatprep.subr.bf16.mxu0 0
    %915 = vmatpush1.bf16.msra.mxu0 %v667
    %916 = vmatprep.subr.bf16.mxu0 0
    %917 = vmatpush1.bf16.msra.mxu0 %v666
    %918 = vmatprep.subr.bf16.mxu0 0
    %919 = vmatpush1.bf16.msra.mxu0 %v665
    %920 = vmatprep.subr.bf16.mxu0 0
    %921 = vmatpush1.bf16.msra.mxu0 %v664
    %922 = vmatprep.subr.bf16.mxu0 0
    %923 = vmatpush1.bf16.msra.mxu0 %v663
    %924 = vmatprep.subr.bf16.mxu0 0
    %925 = vmatpush1.bf16.msra.mxu0 %v662
    %926 = vmatprep.subr.bf16.mxu0 0
    %927 = vmatpush1.bf16.msra.mxu0 %v661
    %928 = vmatprep.subr.bf16.mxu0 0
    %929 = vmatpush1.bf16.msra.mxu0 %v660
    %930 = vmatprep.subr.bf16.mxu0 0
    %931 = vmatpush2.bf16.msra.mxu0 0
    %932 = vmatprep.subr.bf16.mxu0 0
    %933 = vmatpush2.bf16.msra.mxu0 0
    %934 = vmatprep.subr.bf16.mxu0 0
    %935 = vmatpush2.bf16.msra.mxu0 0
    %936 = vmatprep.subr.bf16.mxu0 0
    %937 = vmatpush2.bf16.msra.mxu0 0
    %938 = vmatprep.subr.bf16.mxu0 0
    %939 = vmatpush2.bf16.msra.mxu0 0
    %940 = vmatprep.subr.bf16.mxu0 0
    %941 = vmatpush2.bf16.msra.mxu0 %v670
    %942 = vmatprep.subr.bf16.mxu0 0
    %943 = vmatpush2.bf16.msra.mxu0 %v669
    %944 = vmatprep.subr.bf16.mxu0 0
    %945 = vmatpush2.bf16.msra.mxu0 %v668
    %946 = vmatprep.mubr.bf16.mxu0 %v748
    %947 = vmatmul.mubr.bf16.gmra.mxu0 %v285
    %v948 = vpop.f32.mrf.mxu0
    %v949 = vadd.f32 %v908, %v948
    %v950 = vpop.f32.mrf.mxu0
    %v951 = vpop.f32.mrf.mxu0
    %v952 = vadd.f32 %v911, %v951
    %v953 = vpop.f32.mrf.mxu0
    %954 = vdwg.mxu0
    %v955 = vmax.f32 %v949, 0.0
    %v956 = vmax.f32 %v952, 0.0
    %v957 = vpack.c.bf16 %v956, %v955
    %v958 = vld [vmem:[%s3] sm:$0xff]
    %v959 = vld [vmem:[%s3 + $0x8] sm:$0xff]
    %v960 = vld [vmem:[%s3 + $0x10] sm:$0xff]
    %v961 = vld [vmem:[%s3 + $0x18] sm:$0xff]
    %v962 = vld [vmem:[%s3 + $0x20] sm:$0xff]
    %v963 = vld [vmem:[%s3 + $0x28] sm:$0xff]
    %v964 = vld [vmem:[%s3 + $0x30] sm:$0xff]
    %v965 = vld [vmem:[%s3 + $0x38] sm:$0xff]
    %v966 = vld [vmem:[%s3 + $0x40] sm:$0xff]
    %v967 = vld [vmem:[%s3 + $0x48] sm:$0xff]
    %v968 = vld [vmem:[%s3 + $0x50] sm:$0xff]
    %v969 = vld [vmem:[%s3 + $0x58] sm:$0xff]
    %v970 = vld [vmem:[%s3 + $0x60] sm:$0xff]
    %v971 = vld [vmem:[%s3 + $0x68] sm:$0xff]
    %v972 = vld [vmem:[%s3 + $0x70] sm:$0xff]
    %v973 = vld [vmem:[%s3 + $0x78] sm:$0xff]
    %v974 = vld [vmem:[%s4] sm:$0x3]
    %v976 = vlaneseq
    %v977 = vshrl.u32 %v976, 7
    %v978 = vsub.s32 0, %v977
    %v979 = vrot.slane %v974, %v978
    %v980 = vlaneseq
    %v981 = vshrl.u32 %v980, 7
    %v982 = vsub.s32 1, %v981
    %v983 = vrot.slane %v974, %v982
    %v1002 = vunpack.c.l.b16 %v958
    %v1003 = vunpack.c.h.b16 %v958
    %v1004 = vunpack.c.l.b16 %v959
    %v1005 = vunpack.c.h.b16 %v959
    %v1006 = vunpack.c.l.b16 %v960
    %v1007 = vunpack.c.h.b16 %v960
    %v1008 = vunpack.c.l.b16 %v961
    %v1009 = vunpack.c.h.b16 %v961
    %v1010 = vunpack.c.l.b16 %v962
    %v1011 = vunpack.c.h.b16 %v962
    %v1012 = vunpack.c.l.b16 %v963
    %v1013 = vunpack.c.h.b16 %v963
    %v1014 = vunpack.c.l.b16 %v964
    %v1015 = vunpack.c.h.b16 %v964
    %v1016 = vunpack.c.l.b16 %v965
    %v1017 = vunpack.c.h.b16 %v965
    %v1018 = vunpack.c.l.b16 %v966
    %v1019 = vunpack.c.h.b16 %v966
    %v1020 = vunpack.c.l.b16 %v967
    %v1021 = vunpack.c.h.b16 %v967
    %v1022 = vunpack.c.l.b16 %v968
    %v1023 = vunpack.c.h.b16 %v968
    %v1024 = vunpack.c.l.b16 %v969
    %v1025 = vunpack.c.h.b16 %v969
    %v1026 = vunpack.c.l.b16 %v970
    %v1027 = vunpack.c.h.b16 %v970
    %v1028 = vunpack.c.l.b16 %v971
    %v1029 = vunpack.c.h.b16 %v971
    %v1030 = vunpack.c.l.b16 %v972
    %v1031 = vunpack.c.h.b16 %v972
    %v1032 = vunpack.c.l.b16 %v973
    %v1033 = vunpack.c.h.b16 %v973
    %v1034 = vpack.c.b16 %v1004, %v1002
    %v1035 = vpack.c.b16 %v1005, %v1003
    %v1036 = vpack.c.b16 %v1008, %v1006
    %v1037 = vpack.c.b16 %v1009, %v1007
    %v1038 = vpack.c.b16 %v1012, %v1010
    %v1039 = vpack.c.b16 %v1013, %v1011
    %v1040 = vpack.c.b16 %v1016, %v1014
    %v1041 = vpack.c.b16 %v1017, %v1015
    %v1042 = vpack.c.b16 %v1020, %v1018
    %v1043 = vpack.c.b16 %v1021, %v1019
    %v1044 = vpack.c.b16 %v1024, %v1022
    %v1045 = vpack.c.b16 %v1025, %v1023
    %v1046 = vpack.c.b16 %v1028, %v1026
    %v1047 = vpack.c.b16 %v1029, %v1027
    %v1048 = vpack.c.b16 %v1032, %v1030
    %v1049 = vpack.c.b16 %v1033, %v1031
    %1066 = vmatprep.subr.bf16.mxu0 %v1049
    %1067 = vmatpush1.bf16.msra.mxu0 %v1048
    %1068 = vmatprep.subr.bf16.mxu0 %v1047
    %1069 = vmatpush1.bf16.msra.mxu0 %v1046
    %1070 = vmatprep.subr.bf16.mxu0 %v1045
    %1071 = vmatpush1.bf16.msra.mxu0 %v1044
    %1072 = vmatprep.subr.bf16.mxu0 %v1043
    %1073 = vmatpush1.bf16.msra.mxu0 %v1042
    %1074 = vmatprep.subr.bf16.mxu0 %v1041
    %1075 = vmatpush1.bf16.msra.mxu0 %v1040
    %1076 = vmatprep.subr.bf16.mxu0 %v1039
    %1077 = vmatpush1.bf16.msra.mxu0 %v1038
    %1078 = vmatprep.subr.bf16.mxu0 %v1037
    %1079 = vmatpush1.bf16.msra.mxu0 %v1036
    %1080 = vmatprep.subr.bf16.mxu0 %v1035
    %1081 = vmatpush1.bf16.msra.mxu0 %v1034
    %1082 = vmatprep.subr.bf16.mxu0 0
    %1083 = vmatpush2.bf16.msra.mxu0 0
    %1084 = vmatprep.subr.bf16.mxu0 0
    %1085 = vmatpush2.bf16.msra.mxu0 0
    %1086 = vmatprep.subr.bf16.mxu0 0
    %1087 = vmatpush2.bf16.msra.mxu0 0
    %1088 = vmatprep.subr.bf16.mxu0 0
    %1089 = vmatpush2.bf16.msra.mxu0 0
    %1090 = vmatprep.subr.bf16.mxu0 0
    %1091 = vmatpush2.bf16.msra.mxu0 0
    %1092 = vmatprep.subr.bf16.mxu0 0
    %1093 = vmatpush2.bf16.msra.mxu0 0
    %1094 = vmatprep.subr.bf16.mxu0 0
    %1095 = vmatpush2.bf16.msra.mxu0 0
    %1096 = vmatprep.subr.bf16.mxu0 0
    %1097 = vmatpush2.bf16.msra.mxu0 0
    %1098 = vmatprep.mubr.bf16.mxu0 0
    %1099 = vmatmul.mubr.bf16.gmra.mxu0 %v957
    %v1100 = vpop.f32.mrf.mxu0
    %v1101 = vadd.f32 %v979, %v1100
    %v1102 = vpop.f32.mrf.mxu0
    %v1103 = vadd.f32 %v983, %v1102
    %v1104 = vpop.f32.mrf.mxu0
    %v1105 = vadd.f32 %v979, %v1104
    %v1106 = vpop.f32.mrf.mxu0
    %v1107 = vadd.f32 %v983, %v1106
    %1108 = vdwg.mxu0
    %v1109 = vmax.f32 %v1101, 0.0
    %v1110 = vmax.f32 %v1103, 0.0
    %v1111 = vmax.f32 %v1105, 0.0
    %v1112 = vmax.f32 %v1107, 0.0
    %v1113 = vpack.c.bf16 %v1111, %v1109
    %v1114 = vpack.c.bf16 %v1112, %v1110
    %v1115 = vld [vmem:[#allocation4] sm:$0xff]
    %v1116 = vld [vmem:[#allocation4 + $0x8] sm:$0xff]
    %v1117 = vld [vmem:[#allocation4 + $0x10] sm:$0xff]
    %v1118 = vld [vmem:[#allocation4 + $0x18] sm:$0xff]
    %v1119 = vld [vmem:[#allocation4 + $0x20] sm:$0xff]
    %v1120 = vld [vmem:[#allocation4 + $0x28] sm:$0xff]
    %v1121 = vld [vmem:[#allocation4 + $0x30] sm:$0xff]
    %v1122 = vld [vmem:[#allocation4 + $0x38] sm:$0xff]
    %v1123 = vld [vmem:[#allocation4 + $0x40] sm:$0xff]
    %v1124 = vld [vmem:[#allocation4 + $0x48] sm:$0xff]
    %v1125 = vld [vmem:[#allocation4 + $0x50] sm:$0xff]
    %v1126 = vld [vmem:[#allocation4 + $0x58] sm:$0xff]
    %v1127 = vld [vmem:[#allocation4 + $0x60] sm:$0xff]
    %v1128 = vld [vmem:[#allocation4 + $0x68] sm:$0xff]
    %v1129 = vld [vmem:[#allocation4 + $0x70] sm:$0xff]
    %v1130 = vld [vmem:[#allocation4 + $0x78] sm:$0xff]
    %v1131 = vld [vmem:[#allocation4 + $0x80] sm:$0xff]
    %v1132 = vld [vmem:[#allocation4 + $0x88] sm:$0xff]
    %v1133 = vld [vmem:[#allocation4 + $0x90] sm:$0xff]
    %v1134 = vld [vmem:[#allocation4 + $0x98] sm:$0xff]
    %v1135 = vld [vmem:[#allocation4 + $0xa0] sm:$0xff]
    %v1136 = vld [vmem:[#allocation4 + $0xa8] sm:$0xff]
    %v1137 = vld [vmem:[#allocation4 + $0xb0] sm:$0xff]
    %v1138 = vld [vmem:[#allocation4 + $0xb8] sm:$0xff]
    %v1139 = vld [vmem:[#allocation4 + $0xc0] sm:$0xff]
    %v1140 = vld [vmem:[#allocation4 + $0xc8] sm:$0xff]
    %v1141 = vld [vmem:[#allocation4 + $0xd0] sm:$0xff]
    %v1142 = vld [vmem:[#allocation4 + $0xd8] sm:$0xff]
    %v1143 = vld [vmem:[#allocation4 + $0xe0] sm:$0xff]
    %v1144 = vld [vmem:[#allocation4 + $0xe8] sm:$0xff]
    %v1145 = vld [vmem:[#allocation4 + $0xf0] sm:$0xff]
    %v1146 = vld [vmem:[#allocation4 + $0xf8] sm:$0xff]
    %v1147 = vld [vmem:[#allocation4 + $0x100] sm:$0xff]
    %v1148 = vld [vmem:[#allocation4 + $0x108] sm:$0xff]
    %v1149 = vld [vmem:[#allocation4 + $0x110] sm:$0xff]
    %v1150 = vld [vmem:[#allocation4 + $0x118] sm:$0xff]
    %v1151 = vld [vmem:[#allocation4 + $0x120] sm:$0xff]
    %v1152 = vld [vmem:[#allocation4 + $0x128] sm:$0xff]
    %v1153 = vld [vmem:[#allocation4 + $0x130] sm:$0xff]
    %v1154 = vld [vmem:[#allocation4 + $0x138] sm:$0xff]
    %v1155 = vld [vmem:[#allocation4 + $0x140] sm:$0xff]
    %v1156 = vld [vmem:[#allocation4 + $0x148] sm:$0xff]
    %v1157 = vld [vmem:[#allocation4 + $0x150] sm:$0xff]
    %v1158 = vld [vmem:[#allocation4 + $0x158] sm:$0xff]
    %v1159 = vld [vmem:[#allocation4 + $0x160] sm:$0xff]
    %v1160 = vld [vmem:[#allocation4 + $0x168] sm:$0xff]
    %v1161 = vld [vmem:[#allocation4 + $0x170] sm:$0xff]
    %v1162 = vld [vmem:[#allocation4 + $0x178] sm:$0xff]
    %v1163 = vld [vmem:[#allocation4 + $0x180] sm:$0xff]
    %v1164 = vld [vmem:[#allocation4 + $0x188] sm:$0xff]
    %v1165 = vld [vmem:[#allocation4 + $0x190] sm:$0xff]
    %v1166 = vld [vmem:[#allocation4 + $0x198] sm:$0xff]
    %v1167 = vld [vmem:[#allocation4 + $0x1a0] sm:$0xff]
    %v1168 = vld [vmem:[#allocation4 + $0x1a8] sm:$0xff]
    %v1169 = vld [vmem:[#allocation4 + $0x1b0] sm:$0xff]
    %v1170 = vld [vmem:[#allocation4 + $0x1b8] sm:$0xff]
    %v1171 = vld [vmem:[#allocation4 + $0x1c0] sm:$0xff]
    %v1172 = vld [vmem:[#allocation4 + $0x1c8] sm:$0xff]
    %v1173 = vld [vmem:[#allocation4 + $0x1d0] sm:$0xff]
    %v1174 = vld [vmem:[#allocation4 + $0x1d8] sm:$0xff]
    %v1175 = vld [vmem:[#allocation4 + $0x1e0] sm:$0xff]
    %v1176 = vld [vmem:[#allocation4 + $0x1e8] sm:$0xff]
    %v1177 = vld [vmem:[#allocation4 + $0x1f0] sm:$0xff]
    %v1178 = vld [vmem:[#allocation4 + $0x1f8] sm:$0xff]
    %v1179 = vld [vmem:[%s6] sm:$0xf]
    %v1181 = vlaneseq
    %v1182 = vshrl.u32 %v1181, 7
    %v1183 = vsub.s32 0, %v1182
    %v1184 = vrot.slane %v1179, %v1183
    %v1185 = vlaneseq
    %v1186 = vshrl.u32 %v1185, 7
    %v1187 = vsub.s32 1, %v1186
    %v1188 = vrot.slane %v1179, %v1187
    %v1189 = vlaneseq
    %v1190 = vshrl.u32 %v1189, 7
    %v1191 = vsub.s32 2, %v1190
    %v1192 = vrot.slane %v1179, %v1191
    %v1193 = vlaneseq
    %v1194 = vshrl.u32 %v1193, 7
    %v1195 = vsub.s32 3, %v1194
    %v1196 = vrot.slane %v1179, %v1195
    %v1265 = vunpack.c.l.b16 %v1115
    %v1266 = vunpack.c.h.b16 %v1115
    %v1267 = vunpack.c.l.b16 %v1116
    %v1268 = vunpack.c.h.b16 %v1116
    %v1269 = vunpack.c.l.b16 %v1117
    %v1270 = vunpack.c.h.b16 %v1117
    %v1271 = vunpack.c.l.b16 %v1118
    %v1272 = vunpack.c.h.b16 %v1118
    %v1273 = vunpack.c.l.b16 %v1119
    %v1274 = vunpack.c.h.b16 %v1119
    %v1275 = vunpack.c.l.b16 %v1120
    %v1276 = vunpack.c.h.b16 %v1120
    %v1277 = vunpack.c.l.b16 %v1121
    %v1278 = vunpack.c.h.b16 %v1121
    %v1279 = vunpack.c.l.b16 %v1122
    %v1280 = vunpack.c.h.b16 %v1122
    %v1281 = vunpack.c.l.b16 %v1123
    %v1282 = vunpack.c.h.b16 %v1123
    %v1283 = vunpack.c.l.b16 %v1124
    %v1284 = vunpack.c.h.b16 %v1124
    %v1285 = vunpack.c.l.b16 %v1125
    %v1286 = vunpack.c.h.b16 %v1125
    %v1287 = vunpack.c.l.b16 %v1126
    %v1288 = vunpack.c.h.b16 %v1126
    %v1289 = vunpack.c.l.b16 %v1127
    %v1290 = vunpack.c.h.b16 %v1127
    %v1291 = vunpack.c.l.b16 %v1128
    %v1292 = vunpack.c.h.b16 %v1128
    %v1293 = vunpack.c.l.b16 %v1129
    %v1294 = vunpack.c.h.b16 %v1129
    %v1295 = vunpack.c.l.b16 %v1130
    %v1296 = vunpack.c.h.b16 %v1130
    %v1297 = vunpack.c.l.b16 %v1131
    %v1298 = vunpack.c.h.b16 %v1131
    %v1299 = vunpack.c.l.b16 %v1132
    %v1300 = vunpack.c.h.b16 %v1132
    %v1301 = vunpack.c.l.b16 %v1133
    %v1302 = vunpack.c.h.b16 %v1133
    %v1303 = vunpack.c.l.b16 %v1134
    %v1304 = vunpack.c.h.b16 %v1134
    %v1305 = vunpack.c.l.b16 %v1135
    %v1306 = vunpack.c.h.b16 %v1135
    %v1307 = vunpack.c.l.b16 %v1136
    %v1308 = vunpack.c.h.b16 %v1136
    %v1309 = vunpack.c.l.b16 %v1137
    %v1310 = vunpack.c.h.b16 %v1137
    %v1311 = vunpack.c.l.b16 %v1138
    %v1312 = vunpack.c.h.b16 %v1138
    %v1313 = vunpack.c.l.b16 %v1139
    %v1314 = vunpack.c.h.b16 %v1139
    %v1315 = vunpack.c.l.b16 %v1140
    %v1316 = vunpack.c.h.b16 %v1140
    %v1317 = vunpack.c.l.b16 %v1141
    %v1318 = vunpack.c.h.b16 %v1141
    %v1319 = vunpack.c.l.b16 %v1142
    %v1320 = vunpack.c.h.b16 %v1142
    %v1321 = vunpack.c.l.b16 %v1143
    %v1322 = vunpack.c.h.b16 %v1143
    %v1323 = vunpack.c.l.b16 %v1144
    %v1324 = vunpack.c.h.b16 %v1144
    %v1325 = vunpack.c.l.b16 %v1145
    %v1326 = vunpack.c.h.b16 %v1145
    %v1327 = vunpack.c.l.b16 %v1146
    %v1328 = vunpack.c.h.b16 %v1146
    %v1329 = vunpack.c.l.b16 %v1147
    %v1330 = vunpack.c.h.b16 %v1147
    %v1331 = vunpack.c.l.b16 %v1148
    %v1332 = vunpack.c.h.b16 %v1148
    %v1333 = vunpack.c.l.b16 %v1149
    %v1334 = vunpack.c.h.b16 %v1149
    %v1335 = vunpack.c.l.b16 %v1150
    %v1336 = vunpack.c.h.b16 %v1150
    %v1337 = vunpack.c.l.b16 %v1151
    %v1338 = vunpack.c.h.b16 %v1151
    %v1339 = vunpack.c.l.b16 %v1152
    %v1340 = vunpack.c.h.b16 %v1152
    %v1341 = vunpack.c.l.b16 %v1153
    %v1342 = vunpack.c.h.b16 %v1153
    %v1343 = vunpack.c.l.b16 %v1154
    %v1344 = vunpack.c.h.b16 %v1154
    %v1345 = vunpack.c.l.b16 %v1155
    %v1346 = vunpack.c.h.b16 %v1155
    %v1347 = vunpack.c.l.b16 %v1156
    %v1348 = vunpack.c.h.b16 %v1156
    %v1349 = vunpack.c.l.b16 %v1157
    %v1350 = vunpack.c.h.b16 %v1157
    %v1351 = vunpack.c.l.b16 %v1158
    %v1352 = vunpack.c.h.b16 %v1158
    %v1353 = vunpack.c.l.b16 %v1159
    %v1354 = vunpack.c.h.b16 %v1159
    %v1355 = vunpack.c.l.b16 %v1160
    %v1356 = vunpack.c.h.b16 %v1160
    %v1357 = vunpack.c.l.b16 %v1161
    %v1358 = vunpack.c.h.b16 %v1161
    %v1359 = vunpack.c.l.b16 %v1162
    %v1360 = vunpack.c.h.b16 %v1162
    %v1361 = vunpack.c.l.b16 %v1163
    %v1362 = vunpack.c.h.b16 %v1163
    %v1363 = vunpack.c.l.b16 %v1164
    %v1364 = vunpack.c.h.b16 %v1164
    %v1365 = vunpack.c.l.b16 %v1165
    %v1366 = vunpack.c.h.b16 %v1165
    %v1367 = vunpack.c.l.b16 %v1166
    %v1368 = vunpack.c.h.b16 %v1166
    %v1369 = vunpack.c.l.b16 %v1167
    %v1370 = vunpack.c.h.b16 %v1167
    %v1371 = vunpack.c.l.b16 %v1168
    %v1372 = vunpack.c.h.b16 %v1168
    %v1373 = vunpack.c.l.b16 %v1169
    %v1374 = vunpack.c.h.b16 %v1169
    %v1375 = vunpack.c.l.b16 %v1170
    %v1376 = vunpack.c.h.b16 %v1170
    %v1377 = vunpack.c.l.b16 %v1171
    %v1378 = vunpack.c.h.b16 %v1171
    %v1379 = vunpack.c.l.b16 %v1172
    %v1380 = vunpack.c.h.b16 %v1172
    %v1381 = vunpack.c.l.b16 %v1173
    %v1382 = vunpack.c.h.b16 %v1173
    %v1383 = vunpack.c.l.b16 %v1174
    %v1384 = vunpack.c.h.b16 %v1174
    %v1385 = vunpack.c.l.b16 %v1175
    %v1386 = vunpack.c.h.b16 %v1175
    %v1387 = vunpack.c.l.b16 %v1176
    %v1388 = vunpack.c.h.b16 %v1176
    %v1389 = vunpack.c.l.b16 %v1177
    %v1390 = vunpack.c.h.b16 %v1177
    %v1391 = vunpack.c.l.b16 %v1178
    %v1392 = vunpack.c.h.b16 %v1178
    %v1393 = vpack.c.b16 %v1269, %v1265
    %v1394 = vpack.c.b16 %v1270, %v1266
    %v1395 = vpack.c.b16 %v1271, %v1267
    %v1396 = vpack.c.b16 %v1272, %v1268
    %v1397 = vpack.c.b16 %v1277, %v1273
    %v1398 = vpack.c.b16 %v1278, %v1274
    %v1399 = vpack.c.b16 %v1279, %v1275
    %v1400 = vpack.c.b16 %v1280, %v1276
    %v1401 = vpack.c.b16 %v1285, %v1281
    %v1402 = vpack.c.b16 %v1286, %v1282
    %v1403 = vpack.c.b16 %v1287, %v1283
    %v1404 = vpack.c.b16 %v1288, %v1284
    %v1405 = vpack.c.b16 %v1293, %v1289
    %v1406 = vpack.c.b16 %v1294, %v1290
    %v1407 = vpack.c.b16 %v1295, %v1291
    %v1408 = vpack.c.b16 %v1296, %v1292
    %v1409 = vpack.c.b16 %v1301, %v1297
    %v1410 = vpack.c.b16 %v1302, %v1298
    %v1411 = vpack.c.b16 %v1303, %v1299
    %v1412 = vpack.c.b16 %v1304, %v1300
    %v1413 = vpack.c.b16 %v1309, %v1305
    %v1414 = vpack.c.b16 %v1310, %v1306
    %v1415 = vpack.c.b16 %v1311, %v1307
    %v1416 = vpack.c.b16 %v1312, %v1308
    %v1417 = vpack.c.b16 %v1317, %v1313
    %v1418 = vpack.c.b16 %v1318, %v1314
    %v1419 = vpack.c.b16 %v1319, %v1315
    %v1420 = vpack.c.b16 %v1320, %v1316
    %v1421 = vpack.c.b16 %v1325, %v1321
    %v1422 = vpack.c.b16 %v1326, %v1322
    %v1423 = vpack.c.b16 %v1327, %v1323
    %v1424 = vpack.c.b16 %v1328, %v1324
    %v1425 = vpack.c.b16 %v1333, %v1329
    %v1426 = vpack.c.b16 %v1334, %v1330
    %v1427 = vpack.c.b16 %v1335, %v1331
    %v1428 = vpack.c.b16 %v1336, %v1332
    %v1429 = vpack.c.b16 %v1341, %v1337
    %v1430 = vpack.c.b16 %v1342, %v1338
    %v1431 = vpack.c.b16 %v1343, %v1339
    %v1432 = vpack.c.b16 %v1344, %v1340
    %v1433 = vpack.c.b16 %v1349, %v1345
    %v1434 = vpack.c.b16 %v1350, %v1346
    %v1435 = vpack.c.b16 %v1351, %v1347
    %v1436 = vpack.c.b16 %v1352, %v1348
    %v1437 = vpack.c.b16 %v1357, %v1353
    %v1438 = vpack.c.b16 %v1358, %v1354
    %v1439 = vpack.c.b16 %v1359, %v1355
    %v1440 = vpack.c.b16 %v1360, %v1356
    %v1441 = vpack.c.b16 %v1365, %v1361
    %v1442 = vpack.c.b16 %v1366, %v1362
    %v1443 = vpack.c.b16 %v1367, %v1363
    %v1444 = vpack.c.b16 %v1368, %v1364
    %v1445 = vpack.c.b16 %v1373, %v1369
    %v1446 = vpack.c.b16 %v1374, %v1370
    %v1447 = vpack.c.b16 %v1375, %v1371
    %v1448 = vpack.c.b16 %v1376, %v1372
    %v1449 = vpack.c.b16 %v1381, %v1377
    %v1450 = vpack.c.b16 %v1382, %v1378
    %v1451 = vpack.c.b16 %v1383, %v1379
    %v1452 = vpack.c.b16 %v1384, %v1380
    %v1453 = vpack.c.b16 %v1389, %v1385
    %v1454 = vpack.c.b16 %v1390, %v1386
    %v1455 = vpack.c.b16 %v1391, %v1387
    %v1456 = vpack.c.b16 %v1392, %v1388
    %1521 = vmatprep.subr.bf16.mxu0 %v1422
    %1522 = vmatpush1.bf16.msra.mxu0 %v1421
    %1523 = vmatprep.subr.bf16.mxu0 %v1418
    %1524 = vmatpush1.bf16.msra.mxu0 %v1417
    %1525 = vmatprep.subr.bf16.mxu0 %v1414
    %1526 = vmatpush1.bf16.msra.mxu0 %v1413
    %1527 = vmatprep.subr.bf16.mxu0 %v1410
    %1528 = vmatpush1.bf16.msra.mxu0 %v1409
    %1529 = vmatprep.subr.bf16.mxu0 %v1406
    %1530 = vmatpush1.bf16.msra.mxu0 %v1405
    %1531 = vmatprep.subr.bf16.mxu0 %v1402
    %1532 = vmatpush1.bf16.msra.mxu0 %v1401
    %1533 = vmatprep.subr.bf16.mxu0 %v1398
    %1534 = vmatpush1.bf16.msra.mxu0 %v1397
    %1535 = vmatprep.subr.bf16.mxu0 %v1394
    %1536 = vmatpush1.bf16.msra.mxu0 %v1393
    %1537 = vmatprep.subr.bf16.mxu0 %v1454
    %1538 = vmatpush2.bf16.msra.mxu0 %v1453
    %1539 = vmatprep.subr.bf16.mxu0 %v1450
    %1540 = vmatpush2.bf16.msra.mxu0 %v1449
    %1541 = vmatprep.subr.bf16.mxu0 %v1446
    %1542 = vmatpush2.bf16.msra.mxu0 %v1445
    %1543 = vmatprep.subr.bf16.mxu0 %v1442
    %1544 = vmatpush2.bf16.msra.mxu0 %v1441
    %1545 = vmatprep.subr.bf16.mxu0 %v1438
    %1546 = vmatpush2.bf16.msra.mxu0 %v1437
    %1547 = vmatprep.subr.bf16.mxu0 %v1434
    %1548 = vmatpush2.bf16.msra.mxu0 %v1433
    %1549 = vmatprep.subr.bf16.mxu0 %v1430
    %1550 = vmatpush2.bf16.msra.mxu0 %v1429
    %1551 = vmatprep.subr.bf16.mxu0 %v1426
    %1552 = vmatpush2.bf16.msra.mxu0 %v1425
    %1553 = vmatprep.mubr.bf16.mxu0 %v1114
    %1554 = vmatmul.mubr.bf16.gmra.mxu0 %v1113
    %v1555 = vpop.f32.mrf.mxu0
    %v1556 = vadd.f32 %v1184, %v1555
    %v1557 = vpop.f32.mrf.mxu0
    %v1558 = vadd.f32 %v1188, %v1557
    %v1559 = vpop.f32.mrf.mxu0
    %v1560 = vadd.f32 %v1184, %v1559
    %v1561 = vpop.f32.mrf.mxu0
    %v1562 = vadd.f32 %v1188, %v1561
    %1563 = vdwg.mxu0
    %1564 = vmatprep.subr.bf16.mxu0 %v1424
    %1565 = vmatpush1.bf16.msra.mxu0 %v1423
    %1566 = vmatprep.subr.bf16.mxu0 %v1420
    %1567 = vmatpush1.bf16.msra.mxu0 %v1419
    %1568 = vmatprep.subr.bf16.mxu0 %v1416
    %1569 = vmatpush1.bf16.msra.mxu0 %v1415
    %1570 = vmatprep.subr.bf16.mxu0 %v1412
    %1571 = vmatpush1.bf16.msra.mxu0 %v1411
    %1572 = vmatprep.subr.bf16.mxu0 %v1408
    %1573 = vmatpush1.bf16.msra.mxu0 %v1407
    %1574 = vmatprep.subr.bf16.mxu0 %v1404
    %1575 = vmatpush1.bf16.msra.mxu0 %v1403
    %1576 = vmatprep.subr.bf16.mxu0 %v1400
    %1577 = vmatpush1.bf16.msra.mxu0 %v1399
    %1578 = vmatprep.subr.bf16.mxu0 %v1396
    %1579 = vmatpush1.bf16.msra.mxu0 %v1395
    %1580 = vmatprep.subr.bf16.mxu0 %v1456
    %1581 = vmatpush2.bf16.msra.mxu0 %v1455
    %1582 = vmatprep.subr.bf16.mxu0 %v1452
    %1583 = vmatpush2.bf16.msra.mxu0 %v1451
    %1584 = vmatprep.subr.bf16.mxu0 %v1448
    %1585 = vmatpush2.bf16.msra.mxu0 %v1447
    %1586 = vmatprep.subr.bf16.mxu0 %v1444
    %1587 = vmatpush2.bf16.msra.mxu0 %v1443
    %1588 = vmatprep.subr.bf16.mxu0 %v1440
    %1589 = vmatpush2.bf16.msra.mxu0 %v1439
    %1590 = vmatprep.subr.bf16.mxu0 %v1436
    %1591 = vmatpush2.bf16.msra.mxu0 %v1435
    %1592 = vmatprep.subr.bf16.mxu0 %v1432
    %1593 = vmatpush2.bf16.msra.mxu0 %v1431
    %1594 = vmatprep.subr.bf16.mxu0 %v1428
    %1595 = vmatpush2.bf16.msra.mxu0 %v1427
    %1596 = vmatprep.mubr.bf16.mxu0 %v1114
    %1597 = vmatmul.mubr.bf16.gmra.mxu0 %v1113
    %v1598 = vpop.f32.mrf.mxu0
    %v1599 = vadd.f32 %v1192, %v1598
    %v1600 = vpop.f32.mrf.mxu0
    %v1601 = vadd.f32 %v1196, %v1600
    %v1602 = vpop.f32.mrf.mxu0
    %v1603 = vadd.f32 %v1192, %v1602
    %v1604 = vpop.f32.mrf.mxu0
    %v1605 = vadd.f32 %v1196, %v1604
    %1606 = vdwg.mxu0
    %v1607 = vmax.f32 %v1556, 0.0
    %v1608 = vmax.f32 %v1558, 0.0
    %v1609 = vmax.f32 %v1599, 0.0
    %v1610 = vmax.f32 %v1601, 0.0
    %v1611 = vmax.f32 %v1560, 0.0
    %v1612 = vmax.f32 %v1562, 0.0
    %v1613 = vmax.f32 %v1603, 0.0
    %v1614 = vmax.f32 %v1605, 0.0
    %v1615 = vpack.c.bf16 %v1611, %v1607
    %v1616 = vpack.c.bf16 %v1612, %v1608
    %v1617 = vpack.c.bf16 %v1613, %v1609
    %v1618 = vpack.c.bf16 %v1614, %v1610
    %v1619 = vld [vmem:[#allocation6] sm:$0xf]
    %v1620 = vld [vmem:[#allocation6 + $0x4] sm:$0xf]
    %v1621 = vld [vmem:[#allocation6 + $0x8] sm:$0xf]
    %v1622 = vld [vmem:[#allocation6 + $0xc] sm:$0xf]
    %v1623 = vld [vmem:[#allocation6 + $0x10] sm:$0xf]
    %v1624 = vld [vmem:[#allocation6 + $0x14] sm:$0xf]
    %v1625 = vld [vmem:[#allocation6 + $0x18] sm:$0xf]
    %v1626 = vld [vmem:[#allocation6 + $0x1c] sm:$0xf]
    %v1627 = vld [vmem:[#allocation6 + $0x20] sm:$0xf]
    %v1628 = vld [vmem:[#allocation6 + $0x24] sm:$0xf]
    %v1629 = vld [vmem:[#allocation6 + $0x28] sm:$0xf]
    %v1630 = vld [vmem:[#allocation6 + $0x2c] sm:$0xf]
    %v1631 = vld [vmem:[#allocation6 + $0x30] sm:$0xf]
    %v1632 = vld [vmem:[#allocation6 + $0x34] sm:$0xf]
    %v1633 = vld [vmem:[#allocation6 + $0x38] sm:$0xf]
    %v1634 = vld [vmem:[#allocation6 + $0x3c] sm:$0xf]
    %v1635 = vld [vmem:[#allocation6 + $0x40] sm:$0xf]
    %v1636 = vld [vmem:[#allocation6 + $0x44] sm:$0xf]
    %v1637 = vld [vmem:[#allocation6 + $0x48] sm:$0xf]
    %v1638 = vld [vmem:[#allocation6 + $0x4c] sm:$0xf]
    %v1639 = vld [vmem:[#allocation6 + $0x50] sm:$0xf]
    %v1640 = vld [vmem:[#allocation6 + $0x54] sm:$0xf]
    %v1641 = vld [vmem:[#allocation6 + $0x58] sm:$0xf]
    %v1642 = vld [vmem:[#allocation6 + $0x5c] sm:$0xf]
    %v1643 = vld [vmem:[#allocation6 + $0x60] sm:$0xf]
    %v1644 = vld [vmem:[#allocation6 + $0x64] sm:$0xf]
    %v1645 = vld [vmem:[#allocation6 + $0x68] sm:$0xf]
    %v1646 = vld [vmem:[#allocation6 + $0x6c] sm:$0xf]
    %v1647 = vld [vmem:[#allocation6 + $0x70] sm:$0xf]
    %v1648 = vld [vmem:[#allocation6 + $0x74] sm:$0xf]
    %v1649 = vld [vmem:[#allocation6 + $0x78] sm:$0xf]
    %v1650 = vld [vmem:[#allocation6 + $0x7c] sm:$0xf]
    %v1651 = vld [vmem:[#allocation6 + $0x80] sm:$0xf]
    %v1652 = vld [vmem:[#allocation6 + $0x84] sm:$0xf]
    %v1653 = vld [vmem:[#allocation6 + $0x88] sm:$0xf]
    %v1654 = vld [vmem:[#allocation6 + $0x8c] sm:$0xf]
    %v1655 = vld [vmem:[#allocation6 + $0x90] sm:$0xf]
    %v1656 = vld [vmem:[#allocation6 + $0x94] sm:$0xf]
    %v1657 = vld [vmem:[#allocation6 + $0x98] sm:$0xf]
    %v1658 = vld [vmem:[#allocation6 + $0x9c] sm:$0xf]
    %v1659 = vld [vmem:[#allocation6 + $0xa0] sm:$0xf]
    %v1660 = vld [vmem:[#allocation6 + $0xa4] sm:$0xf]
    %v1661 = vld [vmem:[#allocation6 + $0xa8] sm:$0xf]
    %v1662 = vld [vmem:[#allocation6 + $0xac] sm:$0xf]
    %v1663 = vld [vmem:[#allocation6 + $0xb0] sm:$0xf]
    %v1664 = vld [vmem:[#allocation6 + $0xb4] sm:$0xf]
    %v1665 = vld [vmem:[#allocation6 + $0xb8] sm:$0xf]
    %v1666 = vld [vmem:[#allocation6 + $0xbc] sm:$0xf]
    %v1667 = vld [vmem:[#allocation6 + $0xc0] sm:$0xf]
    %v1668 = vld [vmem:[#allocation6 + $0xc4] sm:$0xf]
    %v1669 = vld [vmem:[#allocation6 + $0xc8] sm:$0xf]
    %v1670 = vld [vmem:[#allocation6 + $0xcc] sm:$0xf]
    %v1671 = vld [vmem:[#allocation6 + $0xd0] sm:$0xf]
    %v1672 = vld [vmem:[#allocation6 + $0xd4] sm:$0xf]
    %v1673 = vld [vmem:[#allocation6 + $0xd8] sm:$0xf]
    %v1674 = vld [vmem:[#allocation6 + $0xdc] sm:$0xf]
    %v1675 = vld [vmem:[#allocation6 + $0xe0] sm:$0xf]
    %v1676 = vld [vmem:[#allocation6 + $0xe4] sm:$0xf]
    %v1677 = vld [vmem:[#allocation6 + $0xe8] sm:$0xf]
    %v1678 = vld [vmem:[#allocation6 + $0xec] sm:$0xf]
    %v1679 = vld [vmem:[#allocation6 + $0xf0] sm:$0xf]
    %v1680 = vld [vmem:[#allocation6 + $0xf4] sm:$0xf]
    %v1681 = vld [vmem:[#allocation6 + $0xf8] sm:$0xf]
    %v1682 = vld [vmem:[#allocation6 + $0xfc] sm:$0xf]
    %v1683 = vld [vmem:[%s8] sm:$0x1]
    %v1685 = vlaneseq
    %v1686 = vshrl.u32 %v1685, 7
    %v1687 = vsub.s32 0, %v1686
    %v1688 = vrot.slane %v1683, %v1687
    %v1754 = vunpack.c.l.b16 %v1619
    %v1755 = vunpack.c.l.b16 %v1620
    %v1756 = vunpack.c.l.b16 %v1621
    %v1757 = vunpack.c.l.b16 %v1622
    %v1758 = vunpack.c.l.b16 %v1623
    %v1759 = vunpack.c.l.b16 %v1624
    %v1760 = vunpack.c.l.b16 %v1625
    %v1761 = vunpack.c.l.b16 %v1626
    %v1762 = vunpack.c.l.b16 %v1627
    %v1763 = vunpack.c.l.b16 %v1628
    %v1764 = vunpack.c.l.b16 %v1629
    %v1765 = vunpack.c.l.b16 %v1630
    %v1766 = vunpack.c.l.b16 %v1631
    %v1767 = vunpack.c.l.b16 %v1632
    %v1768 = vunpack.c.l.b16 %v1633
    %v1769 = vunpack.c.l.b16 %v1634
    %v1770 = vunpack.c.l.b16 %v1635
    %v1771 = vunpack.c.l.b16 %v1636
    %v1772 = vunpack.c.l.b16 %v1637
    %v1773 = vunpack.c.l.b16 %v1638
    %v1774 = vunpack.c.l.b16 %v1639
    %v1775 = vunpack.c.l.b16 %v1640
    %v1776 = vunpack.c.l.b16 %v1641
    %v1777 = vunpack.c.l.b16 %v1642
    %v1778 = vunpack.c.l.b16 %v1643
    %v1779 = vunpack.c.l.b16 %v1644
    %v1780 = vunpack.c.l.b16 %v1645
    %v1781 = vunpack.c.l.b16 %v1646
    %v1782 = vunpack.c.l.b16 %v1647
    %v1783 = vunpack.c.l.b16 %v1648
    %v1784 = vunpack.c.l.b16 %v1649
    %v1785 = vunpack.c.l.b16 %v1650
    %v1786 = vunpack.c.l.b16 %v1651
    %v1787 = vunpack.c.l.b16 %v1652
    %v1788 = vunpack.c.l.b16 %v1653
    %v1789 = vunpack.c.l.b16 %v1654
    %v1790 = vunpack.c.l.b16 %v1655
    %v1791 = vunpack.c.l.b16 %v1656
    %v1792 = vunpack.c.l.b16 %v1657
    %v1793 = vunpack.c.l.b16 %v1658
    %v1794 = vunpack.c.l.b16 %v1659
    %v1795 = vunpack.c.l.b16 %v1660
    %v1796 = vunpack.c.l.b16 %v1661
    %v1797 = vunpack.c.l.b16 %v1662
    %v1798 = vunpack.c.l.b16 %v1663
    %v1799 = vunpack.c.l.b16 %v1664
    %v1800 = vunpack.c.l.b16 %v1665
    %v1801 = vunpack.c.l.b16 %v1666
    %v1802 = vunpack.c.l.b16 %v1667
    %v1803 = vunpack.c.l.b16 %v1668
    %v1804 = vunpack.c.l.b16 %v1669
    %v1805 = vunpack.c.l.b16 %v1670
    %v1806 = vunpack.c.l.b16 %v1671
    %v1807 = vunpack.c.l.b16 %v1672
    %v1808 = vunpack.c.l.b16 %v1673
    %v1809 = vunpack.c.l.b16 %v1674
    %v1810 = vunpack.c.l.b16 %v1675
    %v1811 = vunpack.c.l.b16 %v1676
    %v1812 = vunpack.c.l.b16 %v1677
    %v1813 = vunpack.c.l.b16 %v1678
    %v1814 = vunpack.c.l.b16 %v1679
    %v1815 = vunpack.c.l.b16 %v1680
    %v1816 = vunpack.c.l.b16 %v1681
    %v1817 = vunpack.c.l.b16 %v1682
    %v1818 = vpack.c.b16 %v1755, %v1754
    %v1819 = vpack.c.b16 %v1757, %v1756
    %v1820 = vpack.c.b16 %v1759, %v1758
    %v1821 = vpack.c.b16 %v1761, %v1760
    %v1822 = vpack.c.b16 %v1763, %v1762
    %v1823 = vpack.c.b16 %v1765, %v1764
    %v1824 = vpack.c.b16 %v1767, %v1766
    %v1825 = vpack.c.b16 %v1769, %v1768
    %v1826 = vpack.c.b16 %v1771, %v1770
    %v1827 = vpack.c.b16 %v1773, %v1772
    %v1828 = vpack.c.b16 %v1775, %v1774
    %v1829 = vpack.c.b16 %v1777, %v1776
    %v1830 = vpack.c.b16 %v1779, %v1778
    %v1831 = vpack.c.b16 %v1781, %v1780
    %v1832 = vpack.c.b16 %v1783, %v1782
    %v1833 = vpack.c.b16 %v1785, %v1784
    %v1834 = vpack.c.b16 %v1787, %v1786
    %v1835 = vpack.c.b16 %v1789, %v1788
    %v1836 = vpack.c.b16 %v1791, %v1790
    %v1837 = vpack.c.b16 %v1793, %v1792
    %v1838 = vpack.c.b16 %v1795, %v1794
    %v1839 = vpack.c.b16 %v1797, %v1796
    %v1840 = vpack.c.b16 %v1799, %v1798
    %v1841 = vpack.c.b16 %v1801, %v1800
    %v1842 = vpack.c.b16 %v1803, %v1802
    %v1843 = vpack.c.b16 %v1805, %v1804
    %v1844 = vpack.c.b16 %v1807, %v1806
    %v1845 = vpack.c.b16 %v1809, %v1808
    %v1846 = vpack.c.b16 %v1811, %v1810
    %v1847 = vpack.c.b16 %v1813, %v1812
    %v1848 = vpack.c.b16 %v1815, %v1814
    %v1849 = vpack.c.b16 %v1817, %v1816
    %1882 = vmatprep.subr.bf16.mxu0 0
    %1883 = vmatpush1.bf16.msra.mxu0 %v1825
    %1884 = vmatprep.subr.bf16.mxu0 0
    %1885 = vmatpush1.bf16.msra.mxu0 %v1824
    %1886 = vmatprep.subr.bf16.mxu0 0
    %1887 = vmatpush1.bf16.msra.mxu0 %v1823
    %1888 = vmatprep.subr.bf16.mxu0 0
    %1889 = vmatpush1.bf16.msra.mxu0 %v1822
    %1890 = vmatprep.subr.bf16.mxu0 0
    %1891 = vmatpush1.bf16.msra.mxu0 %v1821
    %1892 = vmatprep.subr.bf16.mxu0 0
    %1893 = vmatpush1.bf16.msra.mxu0 %v1820
    %1894 = vmatprep.subr.bf16.mxu0 0
    %1895 = vmatpush1.bf16.msra.mxu0 %v1819
    %1896 = vmatprep.subr.bf16.mxu0 0
    %1897 = vmatpush1.bf16.msra.mxu0 %v1818
    %1898 = vmatprep.subr.bf16.mxu0 0
    %1899 = vmatpush2.bf16.msra.mxu0 %v1833
    %1900 = vmatprep.subr.bf16.mxu0 0
    %1901 = vmatpush2.bf16.msra.mxu0 %v1832
    %1902 = vmatprep.subr.bf16.mxu0 0
    %1903 = vmatpush2.bf16.msra.mxu0 %v1831
    %1904 = vmatprep.subr.bf16.mxu0 0
    %1905 = vmatpush2.bf16.msra.mxu0 %v1830
    %1906 = vmatprep.subr.bf16.mxu0 0
    %1907 = vmatpush2.bf16.msra.mxu0 %v1829
    %1908 = vmatprep.subr.bf16.mxu0 0
    %1909 = vmatpush2.bf16.msra.mxu0 %v1828
    %1910 = vmatprep.subr.bf16.mxu0 0
    %1911 = vmatpush2.bf16.msra.mxu0 %v1827
    %1912 = vmatprep.subr.bf16.mxu0 0
    %1913 = vmatpush2.bf16.msra.mxu0 %v1826
    %1914 = vmatprep.mubr.bf16.mxu0 %v1616
    %1915 = vmatmul.mubr.bf16.gmra.mxu0 %v1615
    %v1916 = vpop.f32.mrf.mxu0
    %v1917 = vadd.f32 %v1688, %v1916
    %v1918 = vpop.f32.mrf.mxu0
    %v1919 = vpop.f32.mrf.mxu0
    %v1920 = vadd.f32 %v1688, %v1919
    %v1921 = vpop.f32.mrf.mxu0
    %1922 = vdwg.mxu0
    %1923 = vmatprep.subr.bf16.mxu0 0
    %1924 = vmatpush1.bf16.msra.mxu0 %v1841
    %1925 = vmatprep.subr.bf16.mxu0 0
    %1926 = vmatpush1.bf16.msra.mxu0 %v1840
    %1927 = vmatprep.subr.bf16.mxu0 0
    %1928 = vmatpush1.bf16.msra.mxu0 %v1839
    %1929 = vmatprep.subr.bf16.mxu0 0
    %1930 = vmatpush1.bf16.msra.mxu0 %v1838
    %1931 = vmatprep.subr.bf16.mxu0 0
    %1932 = vmatpush1.bf16.msra.mxu0 %v1837
    %1933 = vmatprep.subr.bf16.mxu0 0
    %1934 = vmatpush1.bf16.msra.mxu0 %v1836
    %1935 = vmatprep.subr.bf16.mxu0 0
    %1936 = vmatpush1.bf16.msra.mxu0 %v1835
    %1937 = vmatprep.subr.bf16.mxu0 0
    %1938 = vmatpush1.bf16.msra.mxu0 %v1834
    %1939 = vmatprep.subr.bf16.mxu0 0
    %1940 = vmatpush2.bf16.msra.mxu0 %v1849
    %1941 = vmatprep.subr.bf16.mxu0 0
    %1942 = vmatpush2.bf16.msra.mxu0 %v1848
    %1943 = vmatprep.subr.bf16.mxu0 0
    %1944 = vmatpush2.bf16.msra.mxu0 %v1847
    %1945 = vmatprep.subr.bf16.mxu0 0
    %1946 = vmatpush2.bf16.msra.mxu0 %v1846
    %1947 = vmatprep.subr.bf16.mxu0 0
    %1948 = vmatpush2.bf16.msra.mxu0 %v1845
    %1949 = vmatprep.subr.bf16.mxu0 0
    %1950 = vmatpush2.bf16.msra.mxu0 %v1844
    %1951 = vmatprep.subr.bf16.mxu0 0
    %1952 = vmatpush2.bf16.msra.mxu0 %v1843
    %1953 = vmatprep.subr.bf16.mxu0 0
    %1954 = vmatpush2.bf16.msra.mxu0 %v1842
    %1955 = vmatprep.mubr.bf16.mxu0 %v1618
    %1956 = vmatmul.mubr.bf16.gmra.mxu0 %v1617
    %v1957 = vpop.f32.mrf.mxu0
    %v1958 = vadd.f32 %v1917, %v1957
    %v1959 = vpop.f32.mrf.mxu0
    %v1960 = vpop.f32.mrf.mxu0
    %v1961 = vadd.f32 %v1920, %v1960
    %v1962 = vpop.f32.mrf.mxu0
    %1963 = vdwg.mxu0
    %v1964 = vmax.f32 %v1958, 0.0
    %v1965 = vmax.f32 %v1961, 0.0
    %v1966 = vpack.c.bf16 %v1965, %v1964
    %v1967 = vld [vmem:[%s9] sm:$0xf]
    %v1968 = vld [vmem:[%s9 + $0x4] sm:$0xf]
    %v1969 = vld [vmem:[%s9 + $0x8] sm:$0xf]
    %v1970 = vld [vmem:[%s9 + $0xc] sm:$0xf]
    %v1971 = vld [vmem:[%s9 + $0x10] sm:$0xf]
    %v1972 = vld [vmem:[%s9 + $0x14] sm:$0xf]
    %v1973 = vld [vmem:[%s9 + $0x18] sm:$0xf]
    %v1974 = vld [vmem:[%s9 + $0x1c] sm:$0xf]
    %v1975 = vld [vmem:[%s9 + $0x20] sm:$0xf]
    %v1976 = vld [vmem:[%s9 + $0x24] sm:$0xf]
    %v1977 = vld [vmem:[%s9 + $0x28] sm:$0xf]
    %v1978 = vld [vmem:[%s9 + $0x2c] sm:$0xf]
    %v1979 = vld [vmem:[%s9 + $0x30] sm:$0xf]
    %v1980 = vld [vmem:[%s9 + $0x34] sm:$0xf]
    %v1981 = vld [vmem:[%s9 + $0x38] sm:$0xf]
    %v1982 = vld [vmem:[%s9 + $0x3c] sm:$0xf]
    %v1983 = vld [vmem:[%s10] sm:$0x1]
    %v1985 = vlaneseq
    %v1986 = vshrl.u32 %v1985, 7
    %v1987 = vsub.s32 0, %v1986
    %v1988 = vrot.slane %v1983, %v1987
    %v2006 = vunpack.c.l.b16 %v1967
    %v2007 = vunpack.c.l.b16 %v1968
    %v2008 = vunpack.c.l.b16 %v1969
    %v2009 = vunpack.c.l.b16 %v1970
    %v2010 = vunpack.c.l.b16 %v1971
    %v2011 = vunpack.c.l.b16 %v1972
    %v2012 = vunpack.c.l.b16 %v1973
    %v2013 = vunpack.c.l.b16 %v1974
    %v2014 = vunpack.c.l.b16 %v1975
    %v2015 = vunpack.c.l.b16 %v1976
    %v2016 = vunpack.c.l.b16 %v1977
    %v2017 = vunpack.c.l.b16 %v1978
    %v2018 = vunpack.c.l.b16 %v1979
    %v2019 = vunpack.c.l.b16 %v1980
    %v2020 = vunpack.c.l.b16 %v1981
    %v2021 = vunpack.c.l.b16 %v1982
    %v2022 = vpack.c.b16 %v2007, %v2006
    %v2023 = vpack.c.b16 %v2009, %v2008
    %v2024 = vpack.c.b16 %v2011, %v2010
    %v2025 = vpack.c.b16 %v2013, %v2012
    %v2026 = vpack.c.b16 %v2015, %v2014
    %v2027 = vpack.c.b16 %v2017, %v2016
    %v2028 = vpack.c.b16 %v2019, %v2018
    %v2029 = vpack.c.b16 %v2021, %v2020
    %2038 = vmatprep.subr.bf16.mxu0 0
    %2039 = vmatpush1.bf16.msra.mxu0 %v2029
    %2040 = vmatprep.subr.bf16.mxu0 0
    %2041 = vmatpush1.bf16.msra.mxu0 %v2028
    %2042 = vmatprep.subr.bf16.mxu0 0
    %2043 = vmatpush1.bf16.msra.mxu0 %v2027
    %2044 = vmatprep.subr.bf16.mxu0 0
    %2045 = vmatpush1.bf16.msra.mxu0 %v2026
    %2046 = vmatprep.subr.bf16.mxu0 0
    %2047 = vmatpush1.bf16.msra.mxu0 %v2025
    %2048 = vmatprep.subr.bf16.mxu0 0
    %2049 = vmatpush1.bf16.msra.mxu0 %v2024
    %2050 = vmatprep.subr.bf16.mxu0 0
    %2051 = vmatpush1.bf16.msra.mxu0 %v2023
    %2052 = vmatprep.subr.bf16.mxu0 0
    %2053 = vmatpush1.bf16.msra.mxu0 %v2022
    %2054 = vmatprep.subr.bf16.mxu0 0
    %2055 = vmatpush2.bf16.msra.mxu0 0
    %2056 = vmatprep.subr.bf16.mxu0 0
    %2057 = vmatpush2.bf16.msra.mxu0 0
    %2058 = vmatprep.subr.bf16.mxu0 0
    %2059 = vmatpush2.bf16.msra.mxu0 0
    %2060 = vmatprep.subr.bf16.mxu0 0
    %2061 = vmatpush2.bf16.msra.mxu0 0
    %2062 = vmatprep.subr.bf16.mxu0 0
    %2063 = vmatpush2.bf16.msra.mxu0 0
    %2064 = vmatprep.subr.bf16.mxu0 0
    %2065 = vmatpush2.bf16.msra.mxu0 0
    %2066 = vmatprep.subr.bf16.mxu0 0
    %2067 = vmatpush2.bf16.msra.mxu0 0
    %2068 = vmatprep.subr.bf16.mxu0 0
    %2069 = vmatpush2.bf16.msra.mxu0 0
    %2070 = vmatprep.mubr.bf16.mxu0 0
    %2071 = vmatmul.mubr.bf16.gmra.mxu0 %v1966
    %v2072 = vpop.f32.mrf.mxu0
    %v2073 = vadd.f32 %v1988, %v2072
    %v2074 = vpop.f32.mrf.mxu0
    %v2075 = vpop.f32.mrf.mxu0
    %v2076 = vadd.f32 %v1988, %v2075
    %v2077 = vpop.f32.mrf.mxu0
    %2078 = vdwg.mxu0
    %v2079 = vtanh.pop %v2073
    %v2080 = vtanh.pop %v2076
    %2081 = vst [vmem:[%s11] sm:$0xff] %v2079
    %2082 = vst [vmem:[%s11 + $0x8] sm:$0xff] %v2080
    // Predicated region
    $region58: #{torch_model_forward.1} parent=1 // pred_check
      _
    $region59: #{torch_model_forward.1} parent=1 // pred_check_branch
      %2084 = sbr.rel (0) target = $region61
    $region60: #{torch_model_forward.1} parent=1 // pred_region
      _
    $region61: #{torch_model_forward.1} parent=1 // pred_fallthru
      _
    // Predicated region
    $region62: #{torch_model_forward.1} parent=1 // pred_check
      _
    $region63: #{torch_model_forward.1} parent=1 // pred_check_branch
      %2086 = sbr.rel (0) target = $region65
    $region64: #{torch_model_forward.1} parent=1 // pred_region
      _
    $region65: #{torch_model_forward.1} parent=1 // pred_fallthru
      _
    %2087 = vsyncpa [#allocation3], 1
    %2088 = vsyncpa [#allocation5], 1

</llo_original>
